<compile_context>
chip_gen: v7x
topology: tpu7x:2x2x1
jax: 0.10.0
libtpu: 0.0.40
codegen_flags: <defaults>
</compile_context>

<pallas_src>
import functools

import jax
import jax.numpy as jnp
from jax import lax
from jax.experimental import pallas as pl
from jax.experimental.pallas import tpu as pltpu


def _round_up(x, m):
    return (x + m - 1) // m * m


def _vmem_capacity_bytes():
    # Physical VMEM differs per generation (v5e/v6e: 128 MiB, v7x: 64 MiB/TC).
    try:
        return int(pltpu.get_tpu_info().vmem_capacity_bytes)
    except Exception:
        return 64 * 1024 * 1024  # conservative fallback (v7x)


# ---------------------------------------------------------------------------
# Fused kernel: 3x3 conv (+bias, ReLU) followed by the ConvT(k2,s2) matmul.
# One image per grid step. xp_ref rows are indexed by r = i_pad*(W+2) + j_pad.
# For "virtual" output row q = i*(W+2) + j (j in [0, W+2)), tap (kh,kw) reads
# row q + kh*(W+2) + kw; columns j in {W, W+1} are garbage and dropped later.
# ---------------------------------------------------------------------------
def _bridge_up1_kernel(xp_ref, w3_ref, b3_ref, wt_ref, o_ref, *, H, W, Cin):
    """
    xp_ref : (R, Cin)       bf16  zero-padded flattened image (+ zero guard rows)
    w3_ref : (9*Cin, Cin)   bf16  3x3 conv weights, rows ordered (kh, kw, cin)
    b3_ref : (1, Cin)       f32   conv bias
    wt_ref : (Cin, 4*Cout)  bf16  ConvT weights, columns ordered (kh, kw, cout)
    o_ref  : (M, 4*Cout)    bf16  per-tap ConvT contributions (no bias)
    """
    Wp = W + 2
    M = H * Wp                                            # virtual output rows
    # im2col slab built once in VMEM -> a single K=9*Cin MXU matmul
    # (accumulation stays inside the MXU instead of 9 chained K=Cin dots).
    slab = jnp.concatenate(
        [xp_ref[pl.ds(kh * Wp + kw, M), :] for kh in range(3) for kw in range(3)],
        axis=1)                                           # (M, 9*Cin) bf16
    acc = jnp.dot(slab, w3_ref[...], preferred_element_type=jnp.float32)
    y = jnp.maximum(acc + b3_ref[...], 0.0).astype(jnp.bfloat16)      # bias + ReLU
    # ConvT(k=2,s=2) as one matmul; store bf16 to halve the writeback DMA.
    o_ref[...] = jnp.dot(y, wt_ref[...],
                         preferred_element_type=jnp.float32).astype(jnp.bfloat16)


# ---------------------------------------------------------------------------
# Forward pass (NCHW in / NCHW out, PyTorch semantics)
# ---------------------------------------------------------------------------
def bridge_up1_forward(x_nchw, params):
    w3, b3 = params["conv_w"], params["conv_b"]           # (Cin, Cin, 3, 3), (Cin,)
    wt, bt = params["ct_w"], params["ct_b"]               # (Cin, Cout, 2, 2), (Cout,)
    N, Cin, H, W = x_nchw.shape
    Cout = wt.shape[1]
    Hp, Wp = H + 2, W + 2
    M = H * Wp                                            # virtual output rows / image
    R = _round_up(Hp * Wp + 2, 8)                         # +guard rows for max tap offset

    # Prologue entirely in bf16: cast first, then NHWC transpose, spatial pad
    # (padding=1), flatten spatial, add zero guard rows.
    x = jnp.transpose(x_nchw.astype(jnp.bfloat16), (0, 2, 3, 1))
    xp = jnp.pad(x, ((0, 0), (1, 1), (1, 1), (0, 0)))
    xf = jnp.pad(xp.reshape(N, Hp * Wp, Cin), ((0, 0), (0, R - Hp * Wp), (0, 0)))

    # Weight / bias layouts for the kernel.
    w3m = jnp.transpose(w3, (2, 3, 1, 0)).reshape(9 * Cin, Cin).astype(jnp.bfloat16)
    b3m = b3.reshape(1, Cin).astype(jnp.float32)
    wtm = jnp.transpose(wt, (0, 2, 3, 1)).reshape(Cin, 4 * Cout).astype(jnp.bfloat16)

    # Right-sized VMEM budget from actual block + temporary sizes, capped by the
    # queried physical capacity (v7x: 64 MiB).
    block_bytes = (R * Cin * 2 + 9 * Cin * Cin * 2 + Cin * 4 + Cin * 4 * Cout * 2
                   + M * 9 * Cin * 2 + M * Cin * 4 + M * 4 * Cout * 2)
    vmem_limit = int(min(max(6 * block_bytes, 8 * 1024 * 1024),
                         (3 * _vmem_capacity_bytes()) // 4))

    # TODO(synk): for very large H*W or large N, add spatial row-tiling (1-row halo)
    # and multi-image batch blocks; one image per grid step is right-sized here and
    # gives v7x's two TensorCores a parallel batch axis.
    contrib = pl.pallas_call(
        functools.partial(_bridge_up1_kernel, H=H, W=W, Cin=Cin),
        out_shape=jax.ShapeDtypeStruct((N, M, 4 * Cout), jnp.bfloat16),
        grid=(N,),
        in_specs=[
            pl.BlockSpec((None, R, Cin), lambda n: (n, 0, 0)),     # image (batch squeezed)
            pl.BlockSpec((9 * Cin, Cin), lambda n: (0, 0)),        # conv weights (resident)
            pl.BlockSpec((1, Cin), lambda n: (0, 0)),              # conv bias
            pl.BlockSpec((Cin, 4 * Cout), lambda n: (0, 0)),       # convT weights
        ],
        out_specs=pl.BlockSpec((None, M, 4 * Cout), lambda n: (n, 0, 0)),
        compiler_params=pltpu.CompilerParams(
            dimension_semantics=("parallel",),                     # batch -> 2 TCs on v7x
            vmem_limit_bytes=vmem_limit,
        ),
    )(xf, w3m, b3m, wtm)

    # Epilogue (fused): ConvT(k2,s2) taps never overlap, so the scatter is a pure
    # interleave. Single transpose straight to NCHW, then ONE pad for
    # output_padding=1 and one bias add (the padded border receives bias only).
    contrib = contrib.reshape(N, H, Wp, 2, 2, Cout)[:, :, :W]      # drop garbage cols
    main = jnp.transpose(contrib, (0, 5, 1, 3, 2, 4)).reshape(N, Cout, 2 * H, 2 * W)
    full = lax.pad(main, jnp.zeros((), main.dtype),
                   ((0, 0, 0), (0, 0, 0), (0, 1, 0), (0, 1, 0)))
    return full.astype(jnp.float32) + bt.reshape(1, Cout, 1, 1).astype(jnp.float32)


# ---------------------------------------------------------------------------
# Pure-XLA reference (f32) for a correctness check
# ---------------------------------------------------------------------------
def bridge_up1_reference(x_nchw, params):
    w3, b3 = params["conv_w"], params["conv_b"]
    wt, bt = params["ct_w"], params["ct_b"]
    N, Cin, H, W = x_nchw.shape
    Cout = wt.shape[1]
    x = jnp.transpose(x_nchw, (0, 2, 3, 1)).astype(jnp.float32)
    w3_hwio = jnp.transpose(w3, (2, 3, 1, 0))
    y = lax.conv_general_dilated(x, w3_hwio, (1, 1), ((1, 1), (1, 1)),
                                 dimension_numbers=("NHWC", "HWIO", "NHWC"))
    y = jnp.maximum(y + b3.reshape(1, 1, 1, Cin), 0.0)
    # ConvTranspose2d(k=2, s=2, pad=0) == conv of lhs-dilated input with flipped kernel
    wt_hwio = jnp.transpose(wt, (2, 3, 0, 1))[::-1, ::-1, :, :]
    z = lax.conv_general_dilated(y, wt_hwio, (1, 1), ((1, 1), (1, 1)),
                                 lhs_dilation=(2, 2),
                                 dimension_numbers=("NHWC", "HWIO", "NHWC"))
    z = z + bt.reshape(1, 1, 1, Cout)
    # output_padding=1: extra bottom row / right column receive only the bias.
    b_row = jnp.broadcast_to(bt.reshape(1, 1, 1, Cout), (N, 1, 2 * W, Cout))
    z = jnp.concatenate([z, b_row], axis=1)
    b_col = jnp.broadcast_to(bt.reshape(1, 1, 1, Cout), (N, 2 * H + 1, 1, Cout))
    z = jnp.concatenate([z, b_col], axis=2)
    return jnp.transpose(z, (0, 3, 1, 2))


if __name__ == "__main__":
    key = jax.random.PRNGKey(0)
    kx, kw1, kb1, kw2, kb2 = jax.random.split(key, 5)

    N, Cin, Cout, H, W = 2, 64, 32, 16, 16
    x = jax.random.normal(kx, (N, Cin, H, W), jnp.float32)
    params = {
        "conv_w": ((2.0 / (Cin * 9)) ** 0.5)
                  * jax.random.normal(kw1, (Cin, Cin, 3, 3), jnp.float32),
        "conv_b": 0.05 * jax.random.normal(kb1, (Cin,), jnp.float32),
        "ct_w": ((2.0 / (Cin * 4)) ** 0.5)
                * jax.random.normal(kw2, (Cin, Cout, 2, 2), jnp.float32),
        "ct_b": 0.05 * jax.random.normal(kb2, (Cout,), jnp.float32),
    }

    fwd = jax.jit(bridge_up1_forward)
    y = jax.block_until_ready(fwd(x, params))

    # shape: (H-1)*2 + 2 + output_padding(1) = 2H+1
    assert y.shape == (N, Cout, 2 * H + 1, 2 * W + 1), y.shape
    assert bool(jnp.all(jnp.isfinite(y)))

    ref = bridge_up1_reference(x, params)
    err = float(jnp.max(jnp.abs(y - ref)) / (jnp.max(jnp.abs(ref)) + 1e-6))
    assert err < 5e-2, f"max relative error too large: {err}"   # bf16 MXU tolerance

    print("KERNEL_OK")
</pallas_src>

<mosaic_0001>
module attributes {stable_mosaic.version = 11 : i64} {
  func.func @_bridge_up1_kernel(%arg0: i32, %arg1: memref<1x328x64xbf16, #tpu.memory_space<vmem>>, %arg2: memref<576x64xbf16, #tpu.memory_space<vmem>>, %arg3: memref<1x64xf32, #tpu.memory_space<vmem>>, %arg4: memref<64x128xbf16, #tpu.memory_space<vmem>>, %arg5: memref<1x288x128xbf16, #tpu.memory_space<vmem>>) attributes {dimension_semantics = [#tpu.dimension_semantics<parallel>], iteration_bounds = array<i64: 2>, scalar_prefetch = 0 : i64, scratch_operands = 0 : i64, tpu.core_type = #tpu.core_type<tc>, window_params = [{transform_indices = @transform_0, window_bounds = array<i64: 1, 328, 64>}, {pipeline_mode = #tpu.pipeline_mode<synchronous>, transform_indices = @transform_1, window_bounds = array<i64: 576, 64>}, {pipeline_mode = #tpu.pipeline_mode<synchronous>, transform_indices = @transform_2, window_bounds = array<i64: 1, 64>}, {pipeline_mode = #tpu.pipeline_mode<synchronous>, transform_indices = @transform_3, window_bounds = array<i64: 64, 128>}, {transform_indices = @transform_4, window_bounds = array<i64: 1, 288, 128>}]} {
    %c0 = arith.constant 0 : index
    %c0_0 = arith.constant 0 : index
    %c0_1 = arith.constant 0 : index
    %0 = vector.load %arg1[%c0, %c0_0, %c0_1] : memref<1x328x64xbf16, #tpu.memory_space<vmem>>, vector<1x288x64xbf16>
    %1 = vector.shape_cast %0 : vector<1x288x64xbf16> to vector<288x64xbf16>
    %c0_2 = arith.constant 0 : index
    %c1 = arith.constant 1 : index
    %c0_3 = arith.constant 0 : index
    %2 = vector.load %arg1[%c0_2, %c1, %c0_3] : memref<1x328x64xbf16, #tpu.memory_space<vmem>>, vector<1x288x64xbf16>
    %3 = vector.shape_cast %2 : vector<1x288x64xbf16> to vector<288x64xbf16>
    %c0_4 = arith.constant 0 : index
    %c2 = arith.constant 2 : index
    %c0_5 = arith.constant 0 : index
    %4 = vector.load %arg1[%c0_4, %c2, %c0_5] : memref<1x328x64xbf16, #tpu.memory_space<vmem>>, vector<1x288x64xbf16>
    %5 = vector.shape_cast %4 : vector<1x288x64xbf16> to vector<288x64xbf16>
    %c0_6 = arith.constant 0 : index
    %c18 = arith.constant 18 : index
    %c0_7 = arith.constant 0 : index
    %6 = vector.load %arg1[%c0_6, %c18, %c0_7] : memref<1x328x64xbf16, #tpu.memory_space<vmem>>, vector<1x288x64xbf16>
    %7 = vector.shape_cast %6 : vector<1x288x64xbf16> to vector<288x64xbf16>
    %c0_8 = arith.constant 0 : index
    %c19 = arith.constant 19 : index
    %c0_9 = arith.constant 0 : index
    %8 = vector.load %arg1[%c0_8, %c19, %c0_9] : memref<1x328x64xbf16, #tpu.memory_space<vmem>>, vector<1x288x64xbf16>
    %9 = vector.shape_cast %8 : vector<1x288x64xbf16> to vector<288x64xbf16>
    %c0_10 = arith.constant 0 : index
    %c20 = arith.constant 20 : index
    %c0_11 = arith.constant 0 : index
    %10 = vector.load %arg1[%c0_10, %c20, %c0_11] : memref<1x328x64xbf16, #tpu.memory_space<vmem>>, vector<1x288x64xbf16>
    %11 = vector.shape_cast %10 : vector<1x288x64xbf16> to vector<288x64xbf16>
    %c0_12 = arith.constant 0 : index
    %c36 = arith.constant 36 : index
    %c0_13 = arith.constant 0 : index
    %12 = vector.load %arg1[%c0_12, %c36, %c0_13] : memref<1x328x64xbf16, #tpu.memory_space<vmem>>, vector<1x288x64xbf16>
    %13 = vector.shape_cast %12 : vector<1x288x64xbf16> to vector<288x64xbf16>
    %c0_14 = arith.constant 0 : index
    %c37 = arith.constant 37 : index
    %c0_15 = arith.constant 0 : index
    %14 = vector.load %arg1[%c0_14, %c37, %c0_15] : memref<1x328x64xbf16, #tpu.memory_space<vmem>>, vector<1x288x64xbf16>
    %15 = vector.shape_cast %14 : vector<1x288x64xbf16> to vector<288x64xbf16>
    %c0_16 = arith.constant 0 : index
    %c38 = arith.constant 38 : index
    %c0_17 = arith.constant 0 : index
    %16 = vector.load %arg1[%c0_16, %c38, %c0_17] : memref<1x328x64xbf16, #tpu.memory_space<vmem>>, vector<1x288x64xbf16>
    %17 = vector.shape_cast %16 : vector<1x288x64xbf16> to vector<288x64xbf16>
    %18 = tpu.concatenate %1, %3, %5, %7, %9, %11, %13, %15, %17 in 1 : vector<288x64xbf16>, vector<288x64xbf16>, vector<288x64xbf16>, vector<288x64xbf16>, vector<288x64xbf16>, vector<288x64xbf16>, vector<288x64xbf16>, vector<288x64xbf16>, vector<288x64xbf16> -> vector<288x576xbf16>
    %c0_18 = arith.constant 0 : index
    %c0_19 = arith.constant 0 : index
    %19 = vector.load %arg2[%c0_18, %c0_19] : memref<576x64xbf16, #tpu.memory_space<vmem>>, vector<576x64xbf16>
    %cst = arith.constant dense<0.000000e+00> : vector<288x64xf32>
    %20 = tpu.matmul %18, %19, %cst {dimension_numbers = #tpu.dot_dimension_numbers<[1], [0], [0], [1], [0, 0, 1, 1], [], []>} : vector<288x576xbf16>, vector<576x64xbf16>, vector<288x64xf32> -> vector<288x64xf32>
    %c0_20 = arith.constant 0 : index
    %c0_21 = arith.constant 0 : index
    %21 = vector.load %arg3[%c0_20, %c0_21] : memref<1x64xf32, #tpu.memory_space<vmem>>, vector<1x64xf32>
    %22 = vector.broadcast %21 : vector<1x64xf32> to vector<288x64xf32>
    %23 = arith.addf %20, %22 : vector<288x64xf32>
    %cst_22 = arith.constant 0.000000e+00 : f32
    %24 = vector.broadcast %cst_22 : f32 to vector<288x64xf32>
    %25 = arith.maximumf %23, %24 : vector<288x64xf32>
    %26 = arith.truncf %25 : vector<288x64xf32> to vector<288x64xbf16>
    %c0_23 = arith.constant 0 : index
    %c0_24 = arith.constant 0 : index
    %27 = vector.load %arg4[%c0_23, %c0_24] : memref<64x128xbf16, #tpu.memory_space<vmem>>, vector<64x128xbf16>
    %cst_25 = arith.constant dense<0.000000e+00> : vector<288x128xf32>
    %28 = tpu.matmul %26, %27, %cst_25 {dimension_numbers = #tpu.dot_dimension_numbers<[1], [0], [0], [1], [0, 0, 1, 1], [], []>} : vector<288x64xbf16>, vector<64x128xbf16>, vector<288x128xf32> -> vector<288x128xf32>
    %29 = arith.truncf %28 : vector<288x128xf32> to vector<288x128xbf16>
    %c0_26 = arith.constant 0 : index
    %c0_27 = arith.constant 0 : index
    %c0_28 = arith.constant 0 : index
    %30 = vector.load %arg5[%c0_26, %c0_27, %c0_28] : memref<1x288x128xbf16, #tpu.memory_space<vmem>>, vector<1x288x128xbf16>
    %31 = vector.shape_cast %30 : vector<1x288x128xbf16> to vector<288x128xbf16>
    %32 = vector.shape_cast %29 : vector<288x128xbf16> to vector<1x288x128xbf16>
    tpu.vector_store %arg5[%c0_26, %c0_27, %c0_28], %32 {strides = array<i32>} : memref<1x288x128xbf16, #tpu.memory_space<vmem>>, vector<1x288x128xbf16>,
    return
  }
  func.func @transform_0(%arg0: i32) -> (i32, i32, i32) {
    %c0_i32 = arith.constant 0 : i32
    %c0_i32_0 = arith.constant 0 : i32
    %c0_i32_1 = arith.constant 0 : i32
    return %arg0, %c0_i32, %c0_i32_0 : i32, i32, i32
  }
  func.func @transform_1(%arg0: i32) -> (i32, i32) {
    %c0_i32 = arith.constant 0 : i32
    %c0_i32_0 = arith.constant 0 : i32
    %c0_i32_1 = arith.constant 0 : i32
    return %c0_i32, %c0_i32_0 : i32, i32
  }
  func.func @transform_2(%arg0: i32) -> (i32, i32) {
    %c0_i32 = arith.constant 0 : i32
    %c0_i32_0 = arith.constant 0 : i32
    %c0_i32_1 = arith.constant 0 : i32
    return %c0_i32, %c0_i32_0 : i32, i32
  }
  func.func @transform_3(%arg0: i32) -> (i32, i32) {
    %c0_i32 = arith.constant 0 : i32
    %c0_i32_0 = arith.constant 0 : i32
    %c0_i32_1 = arith.constant 0 : i32
    return %c0_i32, %c0_i32_0 : i32, i32
  }
  func.func @transform_4(%arg0: i32) -> (i32, i32, i32) {
    %c0_i32 = arith.constant 0 : i32
    %c0_i32_0 = arith.constant 0 : i32
    %c0_i32_1 = arith.constant 0 : i32
    return %arg0, %c0_i32, %c0_i32_0 : i32, i32, i32
  }
}

</mosaic_0001>

<llo_original>
// kernel: bridge_up1_forward.1
$region0: #{bridge_up1_forward.1}
  #allocation0 [shape = 'u32[]', space=smem, size = 0x4, offset = 0x4, fixed_abs, tag = 'smem constant byte address 0x4 - core index']
  #allocation1 [shape = 'u32[144,128]{1,0:T(1,128)}', space=vmem, size = 0x12000, scoped, tag = 'internal scratch']
  %s0 = inlined_call_operand.vmem [shape: bf16[2,328,64], index: 0, kind: input, shape index: {}]
  %s1 = inlined_call_operand.vmem [shape: bf16[576,64], index: 1, kind: input, shape index: {}]
  %s2 = inlined_call_operand.vmem [shape: f32[1,64], index: 2, kind: input, shape index: {}]
  %s3 = inlined_call_operand.vmem [shape: bf16[64,128], index: 3, kind: input, shape index: {}]
  %s4 = inlined_call_operand.vmem [shape: bf16[2,288,128], index: 4, kind: output, shape index: {}]
  %s5 = sld [smem:[#allocation0]]
  $region49: #{bridge_up1_forward.1} parent=0
    _
  %s7 = ssub.s32 1, %s5
  %s8 = scalar_select 0, %s7, %s5
  loop: start=0, step=1, limit=4
  $region2: #{bridge_up1_forward.1} parent=0 // loop_pre_header
    _
  $region3: #{bridge_up1_forward.1} parent=0 // loop_header
    %s10 = sphi 0, %s14
    %p11 = scmp.ge.s32.totalorder %s10, 4
    %s20 = sphi 0, %s22
    %s23 = sphi 0, %s20
    %s24 = sphi 0, %s23
    %s40 = sphi 0, %s24
    %s44 = sphi 0, %s44
    %s46 = sphi 0, %s44
    %s47 = sphi 0, %s46
    %s61 = sphi 0, %s47
    %s65 = sphi 0, %s65
    %s67 = sphi 0, %s65
    %s68 = sphi 0, %s67
    %s82 = sphi 0, %s68
    %s86 = sphi 0, %s86
    %s88 = sphi 0, %s86
    %s89 = sphi 0, %s88
    %s103 = sphi 0, %s89
    %s109 = sphi 0, %s111
    %s112 = sphi 0, %s109
    %s113 = sphi 0, %s112
    %s129 = sphi 0, %s113
  $region4: #{bridge_up1_forward.1} parent=0 // loop_header_branch
    %13 = sbr.rel (%p11) target = $region8
  $region5: #{bridge_up1_forward.1} parent=0 // loop_body
    %s15 = ssub.s32 %s10, 1
    %s16 = ssub.s32 %s10, 2
    %s17 = sadd.s32 %s10, 1
    %s18 = ssub.s32 %s10, %s17
    %p19 = scmp.eq.s32.totalorder %s18, 0
    %s21 = sadd.s32 %s20, 1
    %s22 = scalar_select %p19, %s20, %s21
    %p25 = pneg %p19
    %p26 = scmp.eq.s32.totalorder %s10, 1
    %p27 = por %p25, %p26
    %p28 = scmp.ne.s32.totalorder %s20, %s23
    %p29 = scmp.eq.s32.totalorder %s10, 0
    %p30 = por %p28, %p29
    %p31 = scmp.ne.s32.totalorder %s20, %s23
    %p32 = scmp.eq.s32.totalorder %s15, 1
    %p33 = por %p31, %p32
    %p34 = scmp.ne.s32.totalorder %s23, %s24
    %p35 = scmp.eq.s32.totalorder %s15, 0
    %p36 = por %p34, %p35
    %p37 = scmp.ne.s32.totalorder %s23, %s24
    %p38 = scmp.eq.s32.totalorder %s16, 1
    %p39 = por %p37, %p38
    %p41 = scmp.ne.s32.totalorder %s24, %s40
    %p42 = scmp.eq.s32.totalorder %s16, 0
    %p43 = por %p41, %p42
    %s45 = sadd.s32 %s44, 1
    %p48 = scmp.eq.s32.totalorder %s10, 1
    %p49 = scmp.ne.s32.totalorder %s44, %s46
    %p50 = scmp.eq.s32.totalorder %s10, 0
    %p51 = por %p49, %p50
    %p52 = scmp.ne.s32.totalorder %s44, %s46
    %p53 = scmp.eq.s32.totalorder %s15, 1
    %p54 = por %p52, %p53
    %p55 = scmp.ne.s32.totalorder %s46, %s47
    %p56 = scmp.eq.s32.totalorder %s15, 0
    %p57 = por %p55, %p56
    %p58 = scmp.ne.s32.totalorder %s46, %s47
    %p59 = scmp.eq.s32.totalorder %s16, 1
    %p60 = por %p58, %p59
    %p62 = scmp.ne.s32.totalorder %s47, %s61
    %p63 = scmp.eq.s32.totalorder %s16, 0
    %p64 = por %p62, %p63
    %s66 = sadd.s32 %s65, 1
    %p69 = scmp.eq.s32.totalorder %s10, 1
    %p70 = scmp.ne.s32.totalorder %s65, %s67
    %p71 = scmp.eq.s32.totalorder %s10, 0
    %p72 = por %p70, %p71
    %p73 = scmp.ne.s32.totalorder %s65, %s67
    %p74 = scmp.eq.s32.totalorder %s15, 1
    %p75 = por %p73, %p74
    %p76 = scmp.ne.s32.totalorder %s67, %s68
    %p77 = scmp.eq.s32.totalorder %s15, 0
    %p78 = por %p76, %p77
    %p79 = scmp.ne.s32.totalorder %s67, %s68
    %p80 = scmp.eq.s32.totalorder %s16, 1
    %p81 = por %p79, %p80
    %p83 = scmp.ne.s32.totalorder %s68, %s82
    %p84 = scmp.eq.s32.totalorder %s16, 0
    %p85 = por %p83, %p84
    %s87 = sadd.s32 %s86, 1
    %p90 = scmp.eq.s32.totalorder %s10, 1
    %p91 = scmp.ne.s32.totalorder %s86, %s88
    %p92 = scmp.eq.s32.totalorder %s10, 0
    %p93 = por %p91, %p92
    %p94 = scmp.ne.s32.totalorder %s86, %s88
    %p95 = scmp.eq.s32.totalorder %s15, 1
    %p96 = por %p94, %p95
    %p97 = scmp.ne.s32.totalorder %s88, %s89
    %p98 = scmp.eq.s32.totalorder %s15, 0
    %p99 = por %p97, %p98
    %p100 = scmp.ne.s32.totalorder %s88, %s89
    %p101 = scmp.eq.s32.totalorder %s16, 1
    %p102 = por %p100, %p101
    %p104 = scmp.ne.s32.totalorder %s89, %s103
    %p105 = scmp.eq.s32.totalorder %s16, 0
    %p106 = por %p104, %p105
    %s107 = ssub.s32 %s10, %s17
    %p108 = scmp.eq.s32.totalorder %s107, 0
    %s110 = sadd.s32 %s109, 1
    %s111 = scalar_select %p108, %s109, %s110
    %p114 = pneg %p108
    %p115 = scmp.eq.s32.totalorder %s10, 1
    %p116 = por %p114, %p115
    %p117 = scmp.ne.s32.totalorder %s109, %s112
    %p118 = scmp.eq.s32.totalorder %s10, 0
    %p119 = por %p117, %p118
    %p120 = scmp.ne.s32.totalorder %s109, %s112
    %p121 = scmp.eq.s32.totalorder %s15, 1
    %p122 = por %p120, %p121
    %p123 = scmp.ne.s32.totalorder %s112, %s113
    %p124 = scmp.eq.s32.totalorder %s15, 0
    %p125 = por %p123, %p124
    %p126 = scmp.ne.s32.totalorder %s112, %s113
    %p127 = scmp.eq.s32.totalorder %s16, 1
    %p128 = por %p126, %p127
    %p130 = scmp.ne.s32.totalorder %s113, %s129
    %p131 = scmp.eq.s32.totalorder %s16, 0
    %p132 = por %p130, %p131
    %p133 = scmp.le.s32.totalorder 1, %s10
    %p134 = scmp.lt.s32.totalorder %s10, 3
    %p135 = pnand %p133, %p134
    %p136 = pneg %p135
    // Predicated region
    $region9: #{bridge_up1_forward.1} parent=5 // pred_check
      _
    $region10: #{bridge_up1_forward.1} parent=5 // pred_check_branch
      %138 = sbr.rel (%p135) target = $region12
    $region11: #{bridge_up1_forward.1} parent=5 // pred_region
      %s139 = ssub.s32 %s10, 1
      // Predicated region
      $region13: #{bridge_up1_forward.1} parent=11 // pred_check
        %p140 = pneg %p57
      $region14: #{bridge_up1_forward.1} parent=11 // pred_check_branch
        %142 = sbr.rel (%p140) target = $region16
      $region15: #{bridge_up1_forward.1} parent=11 // pred_region
        _
      $region16: #{bridge_up1_forward.1} parent=11 // pred_fallthru
        _
      // Predicated region
      $region17: #{bridge_up1_forward.1} parent=11 // pred_check
        %p143 = pneg %p78
      $region18: #{bridge_up1_forward.1} parent=11 // pred_check_branch
        %145 = sbr.rel (%p143) target = $region20
      $region19: #{bridge_up1_forward.1} parent=11 // pred_region
        _
      $region20: #{bridge_up1_forward.1} parent=11 // pred_fallthru
        _
      // Predicated region
      $region21: #{bridge_up1_forward.1} parent=11 // pred_check
        %p146 = pneg %p99
      $region22: #{bridge_up1_forward.1} parent=11 // pred_check_branch
        %148 = sbr.rel (%p146) target = $region24
      $region23: #{bridge_up1_forward.1} parent=11 // pred_region
        _
      $region24: #{bridge_up1_forward.1} parent=11 // pred_fallthru
        _
    $region12: #{bridge_up1_forward.1} parent=5 // pred_fallthru
      _
    %p149 = scmp.lt.s32.totalorder %s10, 2
    // Predicated region
    $region25: #{bridge_up1_forward.1} parent=5 // pred_check
      %p150 = pneg %p149
    $region26: #{bridge_up1_forward.1} parent=5 // pred_check_branch
      %152 = sbr.rel (%p150) target = $region28
    $region27: #{bridge_up1_forward.1} parent=5 // pred_region
      // Predicated region
      $region29: #{bridge_up1_forward.1} parent=27 // pred_check
        %p153 = pneg %p30
      $region30: #{bridge_up1_forward.1} parent=27 // pred_check_branch
        %155 = sbr.rel (%p153) target = $region32
      $region31: #{bridge_up1_forward.1} parent=27 // pred_region
        %p156 = scmp.lt.s32.totalorder %s10, 1
        %s157 = scalar_select %p156, %s10, 1
        %s158 = smul.addr %s157, 41
        %s159 = smul.addr %s158, 4
        %s160 = scalar_lea.vmem %s0, %s159
      $region32: #{bridge_up1_forward.1} parent=27 // pred_fallthru
        _
    $region28: #{bridge_up1_forward.1} parent=5 // pred_fallthru
      _
    %p161 = scmp.le.s32.totalorder 1, %s10
    %p162 = scmp.lt.s32.totalorder %s10, 3
    %p163 = pnand %p161, %p162
    %p164 = pneg %p163
    // Predicated region
    $region33: #{bridge_up1_forward.1} parent=5 // pred_check
      _
    $region34: #{bridge_up1_forward.1} parent=5 // pred_check_branch
      %166 = sbr.rel (%p163) target = $region36
    $region35: #{bridge_up1_forward.1} parent=5 // pred_region
      %s167 = ssub.s32 %s10, 1
      %p168 = scmp.lt.s32.totalorder %s15, 1
      %s169 = scalar_select %p168, %s15, 1
      %s170 = smul.addr %s169, 41
      %s171 = smul.addr %s170, 4
      %s172 = scalar_lea.vmem %s0, %s171
      %p173 = pneg %p36
      %p174 = pneg %p33
      %p175 = pneg %p57
      %p176 = pneg %p54
      %p177 = pneg %p78
      %p178 = pneg %p75
      %p179 = pneg %p99
      %p180 = pneg %p96
      %p181 = pneg %p125
      %p182 = pneg %p122
      %p183 = scmp.lt.s32.totalorder %s15, 1
      %s184 = scalar_select %p183, %s15, 1
      %s185 = smul.addr %s184, 36
      %s186 = smul.addr %s185, 4
      %s187 = scalar_lea.vmem %s4, %s186
      %p188 = scmp.lt.s32.totalorder %s15, 1
      %s189 = scalar_select %p188, %s15, 1
      %s190 = smul.addr %s189, 41
      %s191 = smul.addr %s190, 4
      %s192 = scalar_lea.vmem %s0, %s191
      %p193 = scmp.lt.s32.totalorder %s15, 1
      %s194 = scalar_select %p193, %s15, 1
      %s195 = smul.addr %s194, 36
      %s196 = smul.addr %s195, 4
      %s197 = scalar_lea.vmem %s4, %s196
      %v199 = vld [vmem:[%s192] sm:$0xf]
      %v200 = vld [vmem:[%s192 + $0x4] sm:$0xf]
      %v201 = vld [vmem:[%s192 + $0x8] sm:$0xf]
      %v202 = vld [vmem:[%s192 + $0xc] sm:$0xf]
      %v203 = vld [vmem:[%s192 + $0x10] sm:$0xf]
      %v204 = vld [vmem:[%s192 + $0x14] sm:$0xf]
      %v205 = vld [vmem:[%s192 + $0x18] sm:$0xf]
      %v206 = vld [vmem:[%s192 + $0x1c] sm:$0xf]
      %v207 = vld [vmem:[%s192 + $0x20] sm:$0xf]
      %v208 = vld [vmem:[%s192 + $0x24] sm:$0xf]
      %v209 = vld [vmem:[%s192 + $0x28] sm:$0xf]
      %v210 = vld [vmem:[%s192 + $0x2c] sm:$0xf]
      %v211 = vld [vmem:[%s192 + $0x30] sm:$0xf]
      %v212 = vld [vmem:[%s192 + $0x34] sm:$0xf]
      %v213 = vld [vmem:[%s192 + $0x38] sm:$0xf]
      %v214 = vld [vmem:[%s192 + $0x3c] sm:$0xf]
      %v215 = vld [vmem:[%s192 + $0x40] sm:$0xf]
      %v216 = vld [vmem:[%s192 + $0x44] sm:$0xf]
      %v217 = vld [vmem:[%s192 + $0x48] sm:$0xf]
      %v218 = vld [vmem:[%s192 + $0x4c] sm:$0xf]
      %v219 = vld [vmem:[%s192 + $0x50] sm:$0xf]
      %v220 = vld [vmem:[%s192 + $0x54] sm:$0xf]
      %v221 = vld [vmem:[%s192 + $0x58] sm:$0xf]
      %v222 = vld [vmem:[%s192 + $0x5c] sm:$0xf]
      %v223 = vld [vmem:[%s192 + $0x60] sm:$0xf]
      %v224 = vld [vmem:[%s192 + $0x64] sm:$0xf]
      %v225 = vld [vmem:[%s192 + $0x68] sm:$0xf]
      %v226 = vld [vmem:[%s192 + $0x6c] sm:$0xf]
      %v227 = vld [vmem:[%s192 + $0x70] sm:$0xf]
      %v228 = vld [vmem:[%s192 + $0x74] sm:$0xf]
      %v229 = vld [vmem:[%s192 + $0x78] sm:$0xf]
      %v230 = vld [vmem:[%s192 + $0x7c] sm:$0xf]
      %v231 = vld [vmem:[%s192 + $0x80] sm:$0xf]
      %v232 = vld [vmem:[%s192 + $0x84] sm:$0xf]
      %v233 = vld [vmem:[%s192 + $0x88] sm:$0xf]
      %v234 = vld [vmem:[%s192 + $0x8c] sm:$0xf]
      %v235 = vld [vmem:[%s192 + $0x90] sm:$0x1]
      %v236 = vld [vmem:[%s192] sm:$0xe]
      %v237 = vld [vmem:[%s192 + $0x8] sm:$0xe]
      %v238 = vld [vmem:[%s192 + $0x90] sm:$0xf]
      %v239 = vld [vmem:[%s192 + $0x94] sm:$0xf]
      %v240 = vld [vmem:[%s192 + $0x98] sm:$0x1]
      %v241 = vld [vmem:[%s192 + $0x98] sm:$0x3]
      %v242 = vld [vmem:[%s192 + $0x8] sm:$0xc]
      %v243 = vld [vmem:[%s192 + $0x10] sm:$0xc]
      %v244 = vld [vmem:[%s192 + $0x98] sm:$0xf]
      %v245 = vld [vmem:[%s192 + $0x9c] sm:$0xf]
      %v246 = vld [vmem:[%s192 + $0xa0] sm:$0x3]
      %v247 = vld [vmem:[%s192 + $0xa0] sm:$0x7]
      %v248 = vld [vmem:[%s192 + $0x10] sm:$0x8]
      %v285 = vunpack.c.l.b16 %v199
      %v286 = vunpack.c.l.b16 %v200
      %v287 = vunpack.c.l.b16 %v201
      %v288 = vunpack.c.l.b16 %v202
      %v289 = vunpack.c.l.b16 %v203
      %v290 = vunpack.c.l.b16 %v204
      %v291 = vunpack.c.l.b16 %v205
      %v292 = vunpack.c.l.b16 %v206
      %v293 = vunpack.c.l.b16 %v207
      %v294 = vunpack.c.l.b16 %v208
      %v295 = vunpack.c.l.b16 %v209
      %v296 = vunpack.c.l.b16 %v210
      %v297 = vunpack.c.l.b16 %v211
      %v298 = vunpack.c.l.b16 %v212
      %v299 = vunpack.c.l.b16 %v213
      %v300 = vunpack.c.l.b16 %v214
      %v301 = vunpack.c.l.b16 %v215
      %v302 = vunpack.c.l.b16 %v216
      %v303 = vunpack.c.l.b16 %v217
      %v304 = vunpack.c.l.b16 %v218
      %v305 = vunpack.c.l.b16 %v219
      %v306 = vunpack.c.l.b16 %v220
      %v307 = vunpack.c.l.b16 %v221
      %v308 = vunpack.c.l.b16 %v222
      %v309 = vunpack.c.l.b16 %v223
      %v310 = vunpack.c.l.b16 %v224
      %v311 = vunpack.c.l.b16 %v225
      %v312 = vunpack.c.l.b16 %v226
      %v313 = vunpack.c.l.b16 %v227
      %v314 = vunpack.c.l.b16 %v228
      %v315 = vunpack.c.l.b16 %v229
      %v316 = vunpack.c.l.b16 %v230
      %v317 = vunpack.c.l.b16 %v231
      %v318 = vunpack.c.l.b16 %v232
      %v319 = vunpack.c.l.b16 %v233
      %v320 = vunpack.c.l.b16 %v234
      %v321 = vpack.c.b16 %v286, %v285
      %v322 = vpack.c.b16 %v288, %v287
      %v323 = vpack.c.b16 %v290, %v289
      %v324 = vpack.c.b16 %v292, %v291
      %v325 = vpack.c.b16 %v294, %v293
      %v326 = vpack.c.b16 %v296, %v295
      %v327 = vpack.c.b16 %v298, %v297
      %v328 = vpack.c.b16 %v300, %v299
      %v329 = vpack.c.b16 %v302, %v301
      %v330 = vpack.c.b16 %v304, %v303
      %v331 = vpack.c.b16 %v306, %v305
      %v332 = vpack.c.b16 %v308, %v307
      %v333 = vpack.c.b16 %v310, %v309
      %v334 = vpack.c.b16 %v312, %v311
      %v335 = vpack.c.b16 %v314, %v313
      %v336 = vpack.c.b16 %v316, %v315
      %v337 = vpack.c.b16 %v318, %v317
      %v338 = vpack.c.b16 %v320, %v319
      %v340 = vunpack.c.l.b16 %v235
      %v341 = vpack.c.b16 %v340, %v340
      %vm342 = vsmask.f32 7424
      %v344 = vshrl.u32 %v321, 16
      %v346 = vshll.u32 %v321, 16
      %v348 = vrot.slane %v346, 1
      %v349 = vor.u32 %v344, %v348
      %v351 = vshll.u32 %v322, 16
      %v353 = vrot.slane %v351, 1
      %v354 = vsel %vm342, %v349, %v353
      %v355 = vshrl.u32 %v322, 16
      %v357 = vor.u32 %v355, %v353
      %v359 = vshll.u32 %v323, 16
      %v361 = vrot.slane %v359, 1
      %v362 = vsel %vm342, %v357, %v361
      %v363 = vshrl.u32 %v323, 16
      %v365 = vor.u32 %v363, %v361
      %v367 = vshll.u32 %v324, 16
      %v369 = vrot.slane %v367, 1
      %v370 = vsel %vm342, %v365, %v369
      %v371 = vshrl.u32 %v324, 16
      %v373 = vor.u32 %v371, %v369
      %v375 = vshll.u32 %v325, 16
      %v377 = vrot.slane %v375, 1
      %v378 = vsel %vm342, %v373, %v377
      %v379 = vshrl.u32 %v325, 16
      %v381 = vor.u32 %v379, %v377
      %v383 = vshll.u32 %v326, 16
      %v385 = vrot.slane %v383, 1
      %v386 = vsel %vm342, %v381, %v385
      %v387 = vshrl.u32 %v326, 16
      %v389 = vor.u32 %v387, %v385
      %v391 = vshll.u32 %v327, 16
      %v393 = vrot.slane %v391, 1
      %v394 = vsel %vm342, %v389, %v393
      %v395 = vshrl.u32 %v327, 16
      %v397 = vor.u32 %v395, %v393
      %v399 = vshll.u32 %v328, 16
      %v401 = vrot.slane %v399, 1
      %v402 = vsel %vm342, %v397, %v401
      %v403 = vshrl.u32 %v328, 16
      %v405 = vor.u32 %v403, %v401
      %v407 = vshll.u32 %v329, 16
      %v409 = vrot.slane %v407, 1
      %v410 = vsel %vm342, %v405, %v409
      %v411 = vshrl.u32 %v329, 16
      %v413 = vor.u32 %v411, %v409
      %v415 = vshll.u32 %v330, 16
      %v417 = vrot.slane %v415, 1
      %v418 = vsel %vm342, %v413, %v417
      %v419 = vshrl.u32 %v330, 16
      %v421 = vor.u32 %v419, %v417
      %v423 = vshll.u32 %v331, 16
      %v425 = vrot.slane %v423, 1
      %v426 = vsel %vm342, %v421, %v425
      %v427 = vshrl.u32 %v331, 16
      %v429 = vor.u32 %v427, %v425
      %v431 = vshll.u32 %v332, 16
      %v433 = vrot.slane %v431, 1
      %v434 = vsel %vm342, %v429, %v433
      %v435 = vshrl.u32 %v332, 16
      %v437 = vor.u32 %v435, %v433
      %v439 = vshll.u32 %v333, 16
      %v441 = vrot.slane %v439, 1
      %v442 = vsel %vm342, %v437, %v441
      %v443 = vshrl.u32 %v333, 16
      %v445 = vor.u32 %v443, %v441
      %v447 = vshll.u32 %v334, 16
      %v449 = vrot.slane %v447, 1
      %v450 = vsel %vm342, %v445, %v449
      %v451 = vshrl.u32 %v334, 16
      %v453 = vor.u32 %v451, %v449
      %v455 = vshll.u32 %v335, 16
      %v457 = vrot.slane %v455, 1
      %v458 = vsel %vm342, %v453, %v457
      %v459 = vshrl.u32 %v335, 16
      %v461 = vor.u32 %v459, %v457
      %v463 = vshll.u32 %v336, 16
      %v465 = vrot.slane %v463, 1
      %v466 = vsel %vm342, %v461, %v465
      %v467 = vshrl.u32 %v336, 16
      %v469 = vor.u32 %v467, %v465
      %v471 = vshll.u32 %v337, 16
      %v473 = vrot.slane %v471, 1
      %v474 = vsel %vm342, %v469, %v473
      %v475 = vshrl.u32 %v337, 16
      %v477 = vor.u32 %v475, %v473
      %v479 = vshll.u32 %v338, 16
      %v481 = vrot.slane %v479, 1
      %v482 = vsel %vm342, %v477, %v481
      %v483 = vshrl.u32 %v338, 16
      %v485 = vor.u32 %v483, %v481
      %v487 = vshll.u32 %v341, 16
      %v489 = vrot.slane %v487, 1
      %v490 = vsel %vm342, %v485, %v489
      %491 = vrot.lane.b32.xlu0 %v354, 64
      %v492 = vpop.permute.xlu0 %491
      %493 = vrot.lane.b32.xlu0 %v362, 64
      %v494 = vpop.permute.xlu0 %493
      %495 = vrot.lane.b32.xlu0 %v370, 64
      %v496 = vpop.permute.xlu0 %495
      %497 = vrot.lane.b32.xlu0 %v378, 64
      %v498 = vpop.permute.xlu0 %497
      %499 = vrot.lane.b32.xlu0 %v386, 64
      %v500 = vpop.permute.xlu0 %499
      %501 = vrot.lane.b32.xlu0 %v394, 64
      %v502 = vpop.permute.xlu0 %501
      %503 = vrot.lane.b32.xlu0 %v402, 64
      %v504 = vpop.permute.xlu0 %503
      %505 = vrot.lane.b32.xlu0 %v410, 64
      %v506 = vpop.permute.xlu0 %505
      %507 = vrot.lane.b32.xlu0 %v418, 64
      %v508 = vpop.permute.xlu0 %507
      %509 = vrot.lane.b32.xlu0 %v426, 64
      %v510 = vpop.permute.xlu0 %509
      %511 = vrot.lane.b32.xlu0 %v434, 64
      %v512 = vpop.permute.xlu0 %511
      %513 = vrot.lane.b32.xlu0 %v442, 64
      %v514 = vpop.permute.xlu0 %513
      %515 = vrot.lane.b32.xlu0 %v450, 64
      %v516 = vpop.permute.xlu0 %515
      %517 = vrot.lane.b32.xlu0 %v458, 64
      %v518 = vpop.permute.xlu0 %517
      %519 = vrot.lane.b32.xlu0 %v466, 64
      %v520 = vpop.permute.xlu0 %519
      %521 = vrot.lane.b32.xlu0 %v474, 64
      %v522 = vpop.permute.xlu0 %521
      %523 = vrot.lane.b32.xlu0 %v482, 64
      %v524 = vpop.permute.xlu0 %523
      %525 = vrot.lane.b32.xlu0 %v490, 64
      %v526 = vpop.permute.xlu0 %525
      %v528 = vunpack.c.l.b16 %v236
      %v529 = vpack.c.b16 %v286, %v528
      %vm530 = vcmask 1046528
      %v531 = vrot.slane %v529, 1
      %v532 = vrot.slane %v322, 1
      %v533 = vsel %vm530, %v531, %v532
      %v534 = vrot.slane %v323, 1
      %v535 = vsel %vm530, %v532, %v534
      %v536 = vrot.slane %v324, 1
      %v537 = vsel %vm530, %v534, %v536
      %v538 = vrot.slane %v325, 1
      %v539 = vsel %vm530, %v536, %v538
      %v540 = vrot.slane %v326, 1
      %v541 = vsel %vm530, %v538, %v540
      %v542 = vrot.slane %v327, 1
      %v543 = vsel %vm530, %v540, %v542
      %v544 = vrot.slane %v328, 1
      %v545 = vsel %vm530, %v542, %v544
      %v546 = vrot.slane %v329, 1
      %v547 = vsel %vm530, %v544, %v546
      %v548 = vrot.slane %v330, 1
      %v549 = vsel %vm530, %v546, %v548
      %v550 = vrot.slane %v331, 1
      %v551 = vsel %vm530, %v548, %v550
      %v552 = vrot.slane %v332, 1
      %v553 = vsel %vm530, %v550, %v552
      %v554 = vrot.slane %v333, 1
      %v555 = vsel %vm530, %v552, %v554
      %v556 = vrot.slane %v334, 1
      %v557 = vsel %vm530, %v554, %v556
      %v558 = vrot.slane %v335, 1
      %v559 = vsel %vm530, %v556, %v558
      %v560 = vrot.slane %v336, 1
      %v561 = vsel %vm530, %v558, %v560
      %v562 = vrot.slane %v337, 1
      %v563 = vsel %vm530, %v560, %v562
      %v564 = vrot.slane %v338, 1
      %v565 = vsel %vm530, %v562, %v564
      %v566 = vrot.slane %v341, 1
      %v567 = vsel %vm530, %v564, %v566
      %v572 = vunpack.c.l.b16 %v237
      %v573 = vunpack.c.l.b16 %v238
      %v574 = vunpack.c.l.b16 %v239
      %v575 = vunpack.c.l.b16 %v240
      %v576 = vpack.c.b16 %v288, %v572
      %v577 = vpack.c.b16 %v574, %v573
      %v578 = vpack.c.b16 %v575, %v575
      %v579 = vrot.slane %v576, 1
      %v580 = vsel %vm530, %v579, %v534
      %v581 = vrot.slane %v577, 1
      %v582 = vsel %vm530, %v564, %v581
      %v583 = vrot.slane %v578, 1
      %v584 = vsel %vm530, %v581, %v583
      %585 = vrot.lane.b32.xlu0 %v580, 64
      %v586 = vpop.permute.xlu0 %585
      %587 = vrot.lane.b32.xlu0 %v537, 64
      %v588 = vpop.permute.xlu0 %587
      %589 = vrot.lane.b32.xlu0 %v539, 64
      %v590 = vpop.permute.xlu0 %589
      %591 = vrot.lane.b32.xlu0 %v541, 64
      %v592 = vpop.permute.xlu0 %591
      %593 = vrot.lane.b32.xlu0 %v543, 64
      %v594 = vpop.permute.xlu0 %593
      %595 = vrot.lane.b32.xlu0 %v545, 64
      %v596 = vpop.permute.xlu0 %595
      %597 = vrot.lane.b32.xlu0 %v547, 64
      %v598 = vpop.permute.xlu0 %597
      %599 = vrot.lane.b32.xlu0 %v549, 64
      %v600 = vpop.permute.xlu0 %599
      %601 = vrot.lane.b32.xlu0 %v551, 64
      %v602 = vpop.permute.xlu0 %601
      %603 = vrot.lane.b32.xlu0 %v553, 64
      %v604 = vpop.permute.xlu0 %603
      %605 = vrot.lane.b32.xlu0 %v555, 64
      %v606 = vpop.permute.xlu0 %605
      %607 = vrot.lane.b32.xlu0 %v557, 64
      %v608 = vpop.permute.xlu0 %607
      %609 = vrot.lane.b32.xlu0 %v559, 64
      %v610 = vpop.permute.xlu0 %609
      %611 = vrot.lane.b32.xlu0 %v561, 64
      %v612 = vpop.permute.xlu0 %611
      %613 = vrot.lane.b32.xlu0 %v563, 64
      %v614 = vpop.permute.xlu0 %613
      %615 = vrot.lane.b32.xlu0 %v565, 64
      %v616 = vpop.permute.xlu0 %615
      %617 = vrot.lane.b32.xlu0 %v582, 64
      %v618 = vpop.permute.xlu0 %617
      %619 = vrot.lane.b32.xlu0 %v584, 64
      %v620 = vpop.permute.xlu0 %619
      %v622 = vunpack.c.l.b16 %v241
      %v623 = vpack.c.b16 %v622, %v622
      %vm624 = vsmask.f32 6400
      %v626 = vshrl.u32 %v576, 16
      %v628 = vrot.slane %v626, 1
      %v629 = vshll.u32 %v576, 16
      %v631 = vrot.slane %v629, 2
      %v632 = vor.u32 %v628, %v631
      %v633 = vrot.slane %v363, 1
      %v634 = vrot.slane %v359, 2
      %v635 = vor.u32 %v633, %v634
      %v636 = vsel %vm624, %v632, %v635
      %v637 = vrot.slane %v371, 1
      %v638 = vrot.slane %v367, 2
      %v639 = vor.u32 %v637, %v638
      %v640 = vsel %vm624, %v635, %v639
      %v641 = vrot.slane %v379, 1
      %v642 = vrot.slane %v375, 2
      %v643 = vor.u32 %v641, %v642
      %v644 = vsel %vm624, %v639, %v643
      %v645 = vrot.slane %v387, 1
      %v646 = vrot.slane %v383, 2
      %v647 = vor.u32 %v645, %v646
      %v648 = vsel %vm624, %v643, %v647
      %v649 = vrot.slane %v395, 1
      %v650 = vrot.slane %v391, 2
      %v651 = vor.u32 %v649, %v650
      %v652 = vsel %vm624, %v647, %v651
      %v653 = vrot.slane %v403, 1
      %v654 = vrot.slane %v399, 2
      %v655 = vor.u32 %v653, %v654
      %v656 = vsel %vm624, %v651, %v655
      %v657 = vrot.slane %v411, 1
      %v658 = vrot.slane %v407, 2
      %v659 = vor.u32 %v657, %v658
      %v660 = vsel %vm624, %v655, %v659
      %v661 = vrot.slane %v419, 1
      %v662 = vrot.slane %v415, 2
      %v663 = vor.u32 %v661, %v662
      %v664 = vsel %vm624, %v659, %v663
      %v665 = vrot.slane %v427, 1
      %v666 = vrot.slane %v423, 2
      %v667 = vor.u32 %v665, %v666
      %v668 = vsel %vm624, %v663, %v667
      %v669 = vrot.slane %v435, 1
      %v670 = vrot.slane %v431, 2
      %v671 = vor.u32 %v669, %v670
      %v672 = vsel %vm624, %v667, %v671
      %v673 = vrot.slane %v443, 1
      %v674 = vrot.slane %v439, 2
      %v675 = vor.u32 %v673, %v674
      %v676 = vsel %vm624, %v671, %v675
      %v677 = vrot.slane %v451, 1
      %v678 = vrot.slane %v447, 2
      %v679 = vor.u32 %v677, %v678
      %v680 = vsel %vm624, %v675, %v679
      %v681 = vrot.slane %v459, 1
      %v682 = vrot.slane %v455, 2
      %v683 = vor.u32 %v681, %v682
      %v684 = vsel %vm624, %v679, %v683
      %v685 = vrot.slane %v467, 1
      %v686 = vrot.slane %v463, 2
      %v687 = vor.u32 %v685, %v686
      %v688 = vsel %vm624, %v683, %v687
      %v689 = vrot.slane %v475, 1
      %v690 = vrot.slane %v471, 2
      %v691 = vor.u32 %v689, %v690
      %v692 = vsel %vm624, %v687, %v691
      %v693 = vrot.slane %v483, 1
      %v694 = vrot.slane %v479, 2
      %v695 = vor.u32 %v693, %v694
      %v696 = vsel %vm624, %v691, %v695
      %v698 = vshrl.u32 %v577, 16
      %v700 = vrot.slane %v698, 1
      %v701 = vshll.u32 %v577, 16
      %v703 = vrot.slane %v701, 2
      %v704 = vor.u32 %v700, %v703
      %v705 = vsel %vm624, %v695, %v704
      %v707 = vshrl.u32 %v623, 16
      %v709 = vrot.slane %v707, 1
      %v710 = vshll.u32 %v623, 16
      %v712 = vrot.slane %v710, 2
      %v713 = vor.u32 %v709, %v712
      %v714 = vsel %vm624, %v704, %v713
      %v716 = vunpack.c.l.b16 %v242
      %v717 = vpack.c.b16 %v288, %v716
      %vm718 = vcmask 1045504
      %v719 = vrot.slane %v717, 2
      %v720 = vrot.slane %v323, 2
      %v721 = vsel %vm718, %v719, %v720
      %v722 = vrot.slane %v324, 2
      %v723 = vsel %vm718, %v720, %v722
      %v724 = vrot.slane %v325, 2
      %v725 = vsel %vm718, %v722, %v724
      %v726 = vrot.slane %v326, 2
      %v727 = vsel %vm718, %v724, %v726
      %v728 = vrot.slane %v327, 2
      %v729 = vsel %vm718, %v726, %v728
      %v730 = vrot.slane %v328, 2
      %v731 = vsel %vm718, %v728, %v730
      %v732 = vrot.slane %v329, 2
      %v733 = vsel %vm718, %v730, %v732
      %v734 = vrot.slane %v330, 2
      %v735 = vsel %vm718, %v732, %v734
      %v736 = vrot.slane %v331, 2
      %v737 = vsel %vm718, %v734, %v736
      %v738 = vrot.slane %v332, 2
      %v739 = vsel %vm718, %v736, %v738
      %v740 = vrot.slane %v333, 2
      %v741 = vsel %vm718, %v738, %v740
      %v742 = vrot.slane %v334, 2
      %v743 = vsel %vm718, %v740, %v742
      %v744 = vrot.slane %v335, 2
      %v745 = vsel %vm718, %v742, %v744
      %v746 = vrot.slane %v336, 2
      %v747 = vsel %vm718, %v744, %v746
      %v748 = vrot.slane %v337, 2
      %v749 = vsel %vm718, %v746, %v748
      %v750 = vrot.slane %v338, 2
      %v751 = vsel %vm718, %v748, %v750
      %v752 = vrot.slane %v577, 2
      %v753 = vsel %vm718, %v750, %v752
      %v754 = vrot.slane %v623, 2
      %v755 = vsel %vm718, %v752, %v754
      %756 = vrot.lane.b32.xlu0 %v721, 64
      %v757 = vpop.permute.xlu0 %756
      %758 = vrot.lane.b32.xlu0 %v723, 64
      %v759 = vpop.permute.xlu0 %758
      %760 = vrot.lane.b32.xlu0 %v725, 64
      %v761 = vpop.permute.xlu0 %760
      %762 = vrot.lane.b32.xlu0 %v727, 64
      %v763 = vpop.permute.xlu0 %762
      %764 = vrot.lane.b32.xlu0 %v729, 64
      %v765 = vpop.permute.xlu0 %764
      %766 = vrot.lane.b32.xlu0 %v731, 64
      %v767 = vpop.permute.xlu0 %766
      %768 = vrot.lane.b32.xlu0 %v733, 64
      %v769 = vpop.permute.xlu0 %768
      %770 = vrot.lane.b32.xlu0 %v735, 64
      %v771 = vpop.permute.xlu0 %770
      %772 = vrot.lane.b32.xlu0 %v737, 64
      %v773 = vpop.permute.xlu0 %772
      %774 = vrot.lane.b32.xlu0 %v739, 64
      %v775 = vpop.permute.xlu0 %774
      %776 = vrot.lane.b32.xlu0 %v741, 64
      %v777 = vpop.permute.xlu0 %776
      %778 = vrot.lane.b32.xlu0 %v743, 64
      %v779 = vpop.permute.xlu0 %778
      %780 = vrot.lane.b32.xlu0 %v745, 64
      %v781 = vpop.permute.xlu0 %780
      %782 = vrot.lane.b32.xlu0 %v747, 64
      %v783 = vpop.permute.xlu0 %782
      %784 = vrot.lane.b32.xlu0 %v749, 64
      %v785 = vpop.permute.xlu0 %784
      %786 = vrot.lane.b32.xlu0 %v751, 64
      %v787 = vpop.permute.xlu0 %786
      %788 = vrot.lane.b32.xlu0 %v753, 64
      %v789 = vpop.permute.xlu0 %788
      %790 = vrot.lane.b32.xlu0 %v755, 64
      %v791 = vpop.permute.xlu0 %790
      %v796 = vunpack.c.l.b16 %v243
      %v797 = vunpack.c.l.b16 %v244
      %v798 = vunpack.c.l.b16 %v245
      %v799 = vunpack.c.l.b16 %v246
      %v800 = vpack.c.b16 %v290, %v796
      %v801 = vpack.c.b16 %v798, %v797
      %v802 = vpack.c.b16 %v799, %v799
      %v803 = vrot.slane %v800, 2
      %v804 = vsel %vm718, %v803, %v722
      %v805 = vrot.slane %v801, 2
      %v806 = vsel %vm718, %v752, %v805
      %v807 = vrot.slane %v802, 2
      %v808 = vsel %vm718, %v805, %v807
      %v810 = vunpack.c.l.b16 %v247
      %v811 = vpack.c.b16 %v810, %v810
      %vm812 = vsmask.f32 5376
      %v814 = vshrl.u32 %v800, 16
      %v816 = vrot.slane %v814, 2
      %v817 = vshll.u32 %v800, 16
      %v819 = vrot.slane %v817, 3
      %v820 = vor.u32 %v816, %v819
      %v821 = vrot.slane %v371, 2
      %v822 = vrot.slane %v367, 3
      %v823 = vor.u32 %v821, %v822
      %v824 = vsel %vm812, %v820, %v823
      %v825 = vrot.slane %v379, 2
      %v826 = vrot.slane %v375, 3
      %v827 = vor.u32 %v825, %v826
      %v828 = vsel %vm812, %v823, %v827
      %v829 = vrot.slane %v387, 2
      %v830 = vrot.slane %v383, 3
      %v831 = vor.u32 %v829, %v830
      %v832 = vsel %vm812, %v827, %v831
      %v833 = vrot.slane %v395, 2
      %v834 = vrot.slane %v391, 3
      %v835 = vor.u32 %v833, %v834
      %v836 = vsel %vm812, %v831, %v835
      %v837 = vrot.slane %v403, 2
      %v838 = vrot.slane %v399, 3
      %v839 = vor.u32 %v837, %v838
      %v840 = vsel %vm812, %v835, %v839
      %v841 = vrot.slane %v411, 2
      %v842 = vrot.slane %v407, 3
      %v843 = vor.u32 %v841, %v842
      %v844 = vsel %vm812, %v839, %v843
      %v845 = vrot.slane %v419, 2
      %v846 = vrot.slane %v415, 3
      %v847 = vor.u32 %v845, %v846
      %v848 = vsel %vm812, %v843, %v847
      %v849 = vrot.slane %v427, 2
      %v850 = vrot.slane %v423, 3
      %v851 = vor.u32 %v849, %v850
      %v852 = vsel %vm812, %v847, %v851
      %v853 = vrot.slane %v435, 2
      %v854 = vrot.slane %v431, 3
      %v855 = vor.u32 %v853, %v854
      %v856 = vsel %vm812, %v851, %v855
      %v857 = vrot.slane %v443, 2
      %v858 = vrot.slane %v439, 3
      %v859 = vor.u32 %v857, %v858
      %v860 = vsel %vm812, %v855, %v859
      %v861 = vrot.slane %v451, 2
      %v862 = vrot.slane %v447, 3
      %v863 = vor.u32 %v861, %v862
      %v864 = vsel %vm812, %v859, %v863
      %v865 = vrot.slane %v459, 2
      %v866 = vrot.slane %v455, 3
      %v867 = vor.u32 %v865, %v866
      %v868 = vsel %vm812, %v863, %v867
      %v869 = vrot.slane %v467, 2
      %v870 = vrot.slane %v463, 3
      %v871 = vor.u32 %v869, %v870
      %v872 = vsel %vm812, %v867, %v871
      %v873 = vrot.slane %v475, 2
      %v874 = vrot.slane %v471, 3
      %v875 = vor.u32 %v873, %v874
      %v876 = vsel %vm812, %v871, %v875
      %v877 = vrot.slane %v483, 2
      %v878 = vrot.slane %v479, 3
      %v879 = vor.u32 %v877, %v878
      %v880 = vsel %vm812, %v875, %v879
      %v881 = vrot.slane %v698, 2
      %v882 = vrot.slane %v701, 3
      %v883 = vor.u32 %v881, %v882
      %v884 = vsel %vm812, %v879, %v883
      %v886 = vshrl.u32 %v801, 16
      %v888 = vrot.slane %v886, 2
      %v889 = vshll.u32 %v801, 16
      %v891 = vrot.slane %v889, 3
      %v892 = vor.u32 %v888, %v891
      %v893 = vsel %vm812, %v883, %v892
      %v895 = vshrl.u32 %v811, 16
      %v897 = vrot.slane %v895, 2
      %v898 = vshll.u32 %v811, 16
      %v900 = vrot.slane %v898, 3
      %v901 = vor.u32 %v897, %v900
      %v902 = vsel %vm812, %v892, %v901
      %903 = vrot.lane.b32.xlu0 %v824, 64
      %v904 = vpop.permute.xlu0 %903
      %905 = vrot.lane.b32.xlu0 %v828, 64
      %v906 = vpop.permute.xlu0 %905
      %907 = vrot.lane.b32.xlu0 %v832, 64
      %v908 = vpop.permute.xlu0 %907
      %909 = vrot.lane.b32.xlu0 %v836, 64
      %v910 = vpop.permute.xlu0 %909
      %911 = vrot.lane.b32.xlu0 %v840, 64
      %v912 = vpop.permute.xlu0 %911
      %913 = vrot.lane.b32.xlu0 %v844, 64
      %v914 = vpop.permute.xlu0 %913
      %915 = vrot.lane.b32.xlu0 %v848, 64
      %v916 = vpop.permute.xlu0 %915
      %917 = vrot.lane.b32.xlu0 %v852, 64
      %v918 = vpop.permute.xlu0 %917
      %919 = vrot.lane.b32.xlu0 %v856, 64
      %v920 = vpop.permute.xlu0 %919
      %921 = vrot.lane.b32.xlu0 %v860, 64
      %v922 = vpop.permute.xlu0 %921
      %923 = vrot.lane.b32.xlu0 %v864, 64
      %v924 = vpop.permute.xlu0 %923
      %925 = vrot.lane.b32.xlu0 %v868, 64
      %v926 = vpop.permute.xlu0 %925
      %927 = vrot.lane.b32.xlu0 %v872, 64
      %v928 = vpop.permute.xlu0 %927
      %929 = vrot.lane.b32.xlu0 %v876, 64
      %v930 = vpop.permute.xlu0 %929
      %931 = vrot.lane.b32.xlu0 %v880, 64
      %v932 = vpop.permute.xlu0 %931
      %933 = vrot.lane.b32.xlu0 %v884, 64
      %v934 = vpop.permute.xlu0 %933
      %935 = vrot.lane.b32.xlu0 %v893, 64
      %v936 = vpop.permute.xlu0 %935
      %937 = vrot.lane.b32.xlu0 %v902, 64
      %v938 = vpop.permute.xlu0 %937
      %v940 = vunpack.c.l.b16 %v248
      %v941 = vpack.c.b16 %v290, %v940
      %vm942 = vcmask 1044480
      %v943 = vrot.slane %v941, 3
      %v944 = vrot.slane %v324, 3
      %v945 = vsel %vm942, %v943, %v944
      %v946 = vrot.slane %v325, 3
      %v947 = vsel %vm942, %v944, %v946
      %v948 = vrot.slane %v326, 3
      %v949 = vsel %vm942, %v946, %v948
      %v950 = vrot.slane %v327, 3
      %v951 = vsel %vm942, %v948, %v950
      %v952 = vrot.slane %v328, 3
      %v953 = vsel %vm942, %v950, %v952
      %v954 = vrot.slane %v329, 3
      %v955 = vsel %vm942, %v952, %v954
      %v956 = vrot.slane %v330, 3
      %v957 = vsel %vm942, %v954, %v956
      %v958 = vrot.slane %v331, 3
      %v959 = vsel %vm942, %v956, %v958
      %v960 = vrot.slane %v332, 3
      %v961 = vsel %vm942, %v958, %v960
      %v962 = vrot.slane %v333, 3
      %v963 = vsel %vm942, %v960, %v962
      %v964 = vrot.slane %v334, 3
      %v965 = vsel %vm942, %v962, %v964
      %v966 = vrot.slane %v335, 3
      %v967 = vsel %vm942, %v964, %v966
      %v968 = vrot.slane %v336, 3
      %v969 = vsel %vm942, %v966, %v968
      %v970 = vrot.slane %v337, 3
      %v971 = vsel %vm942, %v968, %v970
      %v972 = vrot.slane %v338, 3
      %v973 = vsel %vm942, %v970, %v972
      %v974 = vrot.slane %v577, 3
      %v975 = vsel %vm942, %v972, %v974
      %v976 = vrot.slane %v801, 3
      %v977 = vsel %vm942, %v974, %v976
      %v978 = vrot.slane %v811, 3
      %v979 = vsel %vm942, %v976, %v978
      %vm980 = vcmask 523264
      %v982 = vsel %vm980, %v321, %v492
      %v985 = vsel %vm980, %v322, %v494
      %v988 = vsel %vm980, %v323, %v496
      %v991 = vsel %vm980, %v324, %v498
      %v994 = vsel %vm980, %v325, %v500
      %v997 = vsel %vm980, %v326, %v502
      %v1000 = vsel %vm980, %v327, %v504
      %v1003 = vsel %vm980, %v328, %v506
      %v1006 = vsel %vm980, %v329, %v508
      %v1009 = vsel %vm980, %v330, %v510
      %v1012 = vsel %vm980, %v331, %v512
      %v1015 = vsel %vm980, %v332, %v514
      %v1018 = vsel %vm980, %v333, %v516
      %v1021 = vsel %vm980, %v334, %v518
      %v1024 = vsel %vm980, %v335, %v520
      %v1027 = vsel %vm980, %v336, %v522
      %v1030 = vsel %vm980, %v337, %v524
      %v1033 = vsel %vm980, %v338, %v526
      %v1037 = vsel %vm980, %v533, %v586
      %v1041 = vsel %vm980, %v535, %v588
      %v1045 = vsel %vm980, %v537, %v590
      %v1049 = vsel %vm980, %v539, %v592
      %v1053 = vsel %vm980, %v541, %v594
      %v1057 = vsel %vm980, %v543, %v596
      %v1061 = vsel %vm980, %v545, %v598
      %v1065 = vsel %vm980, %v547, %v600
      %v1069 = vsel %vm980, %v549, %v602
      %v1073 = vsel %vm980, %v551, %v604
      %v1077 = vsel %vm980, %v553, %v606
      %v1081 = vsel %vm980, %v555, %v608
      %v1085 = vsel %vm980, %v557, %v610
      %v1089 = vsel %vm980, %v559, %v612
      %v1093 = vsel %vm980, %v561, %v614
      %v1097 = vsel %vm980, %v563, %v616
      %v1101 = vsel %vm980, %v565, %v618
      %v1105 = vsel %vm980, %v567, %v620
      %v1109 = vsel %vm980, %v636, %v757
      %v1113 = vsel %vm980, %v640, %v759
      %v1117 = vsel %vm980, %v644, %v761
      %v1121 = vsel %vm980, %v648, %v763
      %v1125 = vsel %vm980, %v652, %v765
      %v1129 = vsel %vm980, %v656, %v767
      %v1133 = vsel %vm980, %v660, %v769
      %v1137 = vsel %vm980, %v664, %v771
      %v1141 = vsel %vm980, %v668, %v773
      %v1145 = vsel %vm980, %v672, %v775
      %v1149 = vsel %vm980, %v676, %v777
      %v1153 = vsel %vm980, %v680, %v779
      %v1157 = vsel %vm980, %v684, %v781
      %v1161 = vsel %vm980, %v688, %v783
      %v1165 = vsel %vm980, %v692, %v785
      %v1169 = vsel %vm980, %v696, %v787
      %v1173 = vsel %vm980, %v705, %v789
      %v1177 = vsel %vm980, %v714, %v791
      %v1181 = vsel %vm980, %v804, %v904
      %v1185 = vsel %vm980, %v725, %v906
      %v1189 = vsel %vm980, %v727, %v908
      %v1193 = vsel %vm980, %v729, %v910
      %v1197 = vsel %vm980, %v731, %v912
      %v1201 = vsel %vm980, %v733, %v914
      %v1205 = vsel %vm980, %v735, %v916
      %v1209 = vsel %vm980, %v737, %v918
      %v1213 = vsel %vm980, %v739, %v920
      %v1217 = vsel %vm980, %v741, %v922
      %v1221 = vsel %vm980, %v743, %v924
      %v1225 = vsel %vm980, %v745, %v926
      %v1229 = vsel %vm980, %v747, %v928
      %v1233 = vsel %vm980, %v749, %v930
      %v1237 = vsel %vm980, %v751, %v932
      %v1241 = vsel %vm980, %v753, %v934
      %v1245 = vsel %vm980, %v806, %v936
      %v1249 = vsel %vm980, %v808, %v938
      %v1251 = vld [vmem:[%s1] sm:$0xf]
      %v1252 = vld [vmem:[%s1 + $0x4] sm:$0xf]
      %v1253 = vld [vmem:[%s1 + $0x8] sm:$0xf]
      %v1254 = vld [vmem:[%s1 + $0xc] sm:$0xf]
      %v1255 = vld [vmem:[%s1 + $0x10] sm:$0xf]
      %v1256 = vld [vmem:[%s1 + $0x14] sm:$0xf]
      %v1257 = vld [vmem:[%s1 + $0x18] sm:$0xf]
      %v1258 = vld [vmem:[%s1 + $0x1c] sm:$0xf]
      %v1259 = vld [vmem:[%s1 + $0x20] sm:$0xf]
      %v1260 = vld [vmem:[%s1 + $0x24] sm:$0xf]
      %v1261 = vld [vmem:[%s1 + $0x28] sm:$0xf]
      %v1262 = vld [vmem:[%s1 + $0x2c] sm:$0xf]
      %v1263 = vld [vmem:[%s1 + $0x30] sm:$0xf]
      %v1264 = vld [vmem:[%s1 + $0x34] sm:$0xf]
      %v1265 = vld [vmem:[%s1 + $0x38] sm:$0xf]
      %v1266 = vld [vmem:[%s1 + $0x3c] sm:$0xf]
      %v1267 = vld [vmem:[%s1 + $0x40] sm:$0xf]
      %v1268 = vld [vmem:[%s1 + $0x44] sm:$0xf]
      %v1269 = vld [vmem:[%s1 + $0x48] sm:$0xf]
      %v1270 = vld [vmem:[%s1 + $0x4c] sm:$0xf]
      %v1271 = vld [vmem:[%s1 + $0x50] sm:$0xf]
      %v1272 = vld [vmem:[%s1 + $0x54] sm:$0xf]
      %v1273 = vld [vmem:[%s1 + $0x58] sm:$0xf]
      %v1274 = vld [vmem:[%s1 + $0x5c] sm:$0xf]
      %v1275 = vld [vmem:[%s1 + $0x60] sm:$0xf]
      %v1276 = vld [vmem:[%s1 + $0x64] sm:$0xf]
      %v1277 = vld [vmem:[%s1 + $0x68] sm:$0xf]
      %v1278 = vld [vmem:[%s1 + $0x6c] sm:$0xf]
      %v1279 = vld [vmem:[%s1 + $0x70] sm:$0xf]
      %v1280 = vld [vmem:[%s1 + $0x74] sm:$0xf]
      %v1281 = vld [vmem:[%s1 + $0x78] sm:$0xf]
      %v1282 = vld [vmem:[%s1 + $0x7c] sm:$0xf]
      %v1283 = vld [vmem:[%s1 + $0x80] sm:$0xf]
      %v1284 = vld [vmem:[%s1 + $0x84] sm:$0xf]
      %v1285 = vld [vmem:[%s1 + $0x88] sm:$0xf]
      %v1286 = vld [vmem:[%s1 + $0x8c] sm:$0xf]
      %v1287 = vld [vmem:[%s1 + $0x90] sm:$0xf]
      %v1288 = vld [vmem:[%s1 + $0x94] sm:$0xf]
      %v1289 = vld [vmem:[%s1 + $0x98] sm:$0xf]
      %v1290 = vld [vmem:[%s1 + $0x9c] sm:$0xf]
      %v1291 = vld [vmem:[%s1 + $0xa0] sm:$0xf]
      %v1292 = vld [vmem:[%s1 + $0xa4] sm:$0xf]
      %v1293 = vld [vmem:[%s1 + $0xa8] sm:$0xf]
      %v1294 = vld [vmem:[%s1 + $0xac] sm:$0xf]
      %v1295 = vld [vmem:[%s1 + $0xb0] sm:$0xf]
      %v1296 = vld [vmem:[%s1 + $0xb4] sm:$0xf]
      %v1297 = vld [vmem:[%s1 + $0xb8] sm:$0xf]
      %v1298 = vld [vmem:[%s1 + $0xbc] sm:$0xf]
      %v1299 = vld [vmem:[%s1 + $0xc0] sm:$0xf]
      %v1300 = vld [vmem:[%s1 + $0xc4] sm:$0xf]
      %v1301 = vld [vmem:[%s1 + $0xc8] sm:$0xf]
      %v1302 = vld [vmem:[%s1 + $0xcc] sm:$0xf]
      %v1303 = vld [vmem:[%s1 + $0xd0] sm:$0xf]
      %v1304 = vld [vmem:[%s1 + $0xd4] sm:$0xf]
      %v1305 = vld [vmem:[%s1 + $0xd8] sm:$0xf]
      %v1306 = vld [vmem:[%s1 + $0xdc] sm:$0xf]
      %v1307 = vld [vmem:[%s1 + $0xe0] sm:$0xf]
      %v1308 = vld [vmem:[%s1 + $0xe4] sm:$0xf]
      %v1309 = vld [vmem:[%s1 + $0xe8] sm:$0xf]
      %v1310 = vld [vmem:[%s1 + $0xec] sm:$0xf]
      %v1311 = vld [vmem:[%s1 + $0xf0] sm:$0xf]
      %v1312 = vld [vmem:[%s1 + $0xf4] sm:$0xf]
      %v1313 = vld [vmem:[%s1 + $0xf8] sm:$0xf]
      %v1314 = vld [vmem:[%s1 + $0xfc] sm:$0xf]
      %v1315 = vld [vmem:[%s1 + $0x100] sm:$0xf]
      %v1316 = vld [vmem:[%s1 + $0x104] sm:$0xf]
      %v1317 = vld [vmem:[%s1 + $0x108] sm:$0xf]
      %v1318 = vld [vmem:[%s1 + $0x10c] sm:$0xf]
      %v1319 = vld [vmem:[%s1 + $0x110] sm:$0xf]
      %v1320 = vld [vmem:[%s1 + $0x114] sm:$0xf]
      %v1321 = vld [vmem:[%s1 + $0x118] sm:$0xf]
      %v1322 = vld [vmem:[%s1 + $0x11c] sm:$0xf]
      %v1323 = vld [vmem:[%s2] sm:$0x1]
      %v1325 = vlaneseq
      %v1326 = vshrl.u32 %v1325, 7
      %v1327 = vsub.s32 0, %v1326
      %v1328 = vrot.slane %v1323, %v1327
      %v1402 = vunpack.c.l.b16 %v1251
      %v1403 = vunpack.c.l.b16 %v1252
      %v1404 = vunpack.c.l.b16 %v1253
      %v1405 = vunpack.c.l.b16 %v1254
      %v1406 = vunpack.c.l.b16 %v1255
      %v1407 = vunpack.c.l.b16 %v1256
      %v1408 = vunpack.c.l.b16 %v1257
      %v1409 = vunpack.c.l.b16 %v1258
      %v1410 = vunpack.c.l.b16 %v1259
      %v1411 = vunpack.c.l.b16 %v1260
      %v1412 = vunpack.c.l.b16 %v1261
      %v1413 = vunpack.c.l.b16 %v1262
      %v1414 = vunpack.c.l.b16 %v1263
      %v1415 = vunpack.c.l.b16 %v1264
      %v1416 = vunpack.c.l.b16 %v1265
      %v1417 = vunpack.c.l.b16 %v1266
      %v1418 = vunpack.c.l.b16 %v1267
      %v1419 = vunpack.c.l.b16 %v1268
      %v1420 = vunpack.c.l.b16 %v1269
      %v1421 = vunpack.c.l.b16 %v1270
      %v1422 = vunpack.c.l.b16 %v1271
      %v1423 = vunpack.c.l.b16 %v1272
      %v1424 = vunpack.c.l.b16 %v1273
      %v1425 = vunpack.c.l.b16 %v1274
      %v1426 = vunpack.c.l.b16 %v1275
      %v1427 = vunpack.c.l.b16 %v1276
      %v1428 = vunpack.c.l.b16 %v1277
      %v1429 = vunpack.c.l.b16 %v1278
      %v1430 = vunpack.c.l.b16 %v1279
      %v1431 = vunpack.c.l.b16 %v1280
      %v1432 = vunpack.c.l.b16 %v1281
      %v1433 = vunpack.c.l.b16 %v1282
      %v1434 = vunpack.c.l.b16 %v1283
      %v1435 = vunpack.c.l.b16 %v1284
      %v1436 = vunpack.c.l.b16 %v1285
      %v1437 = vunpack.c.l.b16 %v1286
      %v1438 = vunpack.c.l.b16 %v1287
      %v1439 = vunpack.c.l.b16 %v1288
      %v1440 = vunpack.c.l.b16 %v1289
      %v1441 = vunpack.c.l.b16 %v1290
      %v1442 = vunpack.c.l.b16 %v1291
      %v1443 = vunpack.c.l.b16 %v1292
      %v1444 = vunpack.c.l.b16 %v1293
      %v1445 = vunpack.c.l.b16 %v1294
      %v1446 = vunpack.c.l.b16 %v1295
      %v1447 = vunpack.c.l.b16 %v1296
      %v1448 = vunpack.c.l.b16 %v1297
      %v1449 = vunpack.c.l.b16 %v1298
      %v1450 = vunpack.c.l.b16 %v1299
      %v1451 = vunpack.c.l.b16 %v1300
      %v1452 = vunpack.c.l.b16 %v1301
      %v1453 = vunpack.c.l.b16 %v1302
      %v1454 = vunpack.c.l.b16 %v1303
      %v1455 = vunpack.c.l.b16 %v1304
      %v1456 = vunpack.c.l.b16 %v1305
      %v1457 = vunpack.c.l.b16 %v1306
      %v1458 = vunpack.c.l.b16 %v1307
      %v1459 = vunpack.c.l.b16 %v1308
      %v1460 = vunpack.c.l.b16 %v1309
      %v1461 = vunpack.c.l.b16 %v1310
      %v1462 = vunpack.c.l.b16 %v1311
      %v1463 = vunpack.c.l.b16 %v1312
      %v1464 = vunpack.c.l.b16 %v1313
      %v1465 = vunpack.c.l.b16 %v1314
      %v1466 = vunpack.c.l.b16 %v1315
      %v1467 = vunpack.c.l.b16 %v1316
      %v1468 = vunpack.c.l.b16 %v1317
      %v1469 = vunpack.c.l.b16 %v1318
      %v1470 = vunpack.c.l.b16 %v1319
      %v1471 = vunpack.c.l.b16 %v1320
      %v1472 = vunpack.c.l.b16 %v1321
      %v1473 = vunpack.c.l.b16 %v1322
      %v1474 = vpack.c.b16 %v1403, %v1402
      %v1475 = vpack.c.b16 %v1405, %v1404
      %v1476 = vpack.c.b16 %v1407, %v1406
      %v1477 = vpack.c.b16 %v1409, %v1408
      %v1478 = vpack.c.b16 %v1411, %v1410
      %v1479 = vpack.c.b16 %v1413, %v1412
      %v1480 = vpack.c.b16 %v1415, %v1414
      %v1481 = vpack.c.b16 %v1417, %v1416
      %v1482 = vpack.c.b16 %v1419, %v1418
      %v1483 = vpack.c.b16 %v1421, %v1420
      %v1484 = vpack.c.b16 %v1423, %v1422
      %v1485 = vpack.c.b16 %v1425, %v1424
      %v1486 = vpack.c.b16 %v1427, %v1426
      %v1487 = vpack.c.b16 %v1429, %v1428
      %v1488 = vpack.c.b16 %v1431, %v1430
      %v1489 = vpack.c.b16 %v1433, %v1432
      %v1490 = vpack.c.b16 %v1435, %v1434
      %v1491 = vpack.c.b16 %v1437, %v1436
      %v1492 = vpack.c.b16 %v1439, %v1438
      %v1493 = vpack.c.b16 %v1441, %v1440
      %v1494 = vpack.c.b16 %v1443, %v1442
      %v1495 = vpack.c.b16 %v1445, %v1444
      %v1496 = vpack.c.b16 %v1447, %v1446
      %v1497 = vpack.c.b16 %v1449, %v1448
      %v1498 = vpack.c.b16 %v1451, %v1450
      %v1499 = vpack.c.b16 %v1453, %v1452
      %v1500 = vpack.c.b16 %v1455, %v1454
      %v1501 = vpack.c.b16 %v1457, %v1456
      %v1502 = vpack.c.b16 %v1459, %v1458
      %v1503 = vpack.c.b16 %v1461, %v1460
      %v1504 = vpack.c.b16 %v1463, %v1462
      %v1505 = vpack.c.b16 %v1465, %v1464
      %v1506 = vpack.c.b16 %v1467, %v1466
      %v1507 = vpack.c.b16 %v1469, %v1468
      %v1508 = vpack.c.b16 %v1471, %v1470
      %v1509 = vpack.c.b16 %v1473, %v1472
      %v1547 = vsel %vm980, %v945, 0
      %v1550 = vsel %vm980, %v947, 0
      %v1553 = vsel %vm980, %v949, 0
      %v1556 = vsel %vm980, %v951, 0
      %v1559 = vsel %vm980, %v953, 0
      %v1562 = vsel %vm980, %v955, 0
      %v1565 = vsel %vm980, %v957, 0
      %v1568 = vsel %vm980, %v959, 0
      %v1571 = vsel %vm980, %v961, 0
      %v1574 = vsel %vm980, %v963, 0
      %v1577 = vsel %vm980, %v965, 0
      %v1580 = vsel %vm980, %v967, 0
      %v1583 = vsel %vm980, %v969, 0
      %v1586 = vsel %vm980, %v971, 0
      %v1589 = vsel %vm980, %v973, 0
      %v1592 = vsel %vm980, %v975, 0
      %v1595 = vsel %vm980, %v977, 0
      %v1598 = vsel %vm980, %v979, 0
      %1600 = vmatprep.subr.bf16.mxu0 0
      %1601 = vmatpush1.bf16.msra.mxu0 %v1474
      %1602 = vmatprep.subr.bf16.mxu0 0
      %1603 = vmatpush1.bf16.msra.mxu0 %v1475
      %1604 = vmatprep.subr.bf16.mxu0 0
      %1605 = vmatpush1.bf16.msra.mxu0 %v1476
      %1606 = vmatprep.subr.bf16.mxu0 0
      %1607 = vmatpush1.bf16.msra.mxu0 %v1477
      %1608 = vmatprep.subr.bf16.mxu0 0
      %1609 = vmatpush1.bf16.msra.mxu0 %v1478
      %1610 = vmatprep.subr.bf16.mxu0 0
      %1611 = vmatpush1.bf16.msra.mxu0 %v1479
      %1612 = vmatprep.subr.bf16.mxu0 0
      %1613 = vmatpush1.bf16.msra.mxu0 %v1480
      %1614 = vmatprep.subr.bf16.mxu0 0
      %1615 = vmatpush1.bf16.msra.mxu0 %v1481
      %1616 = vmatprep.subr.bf16.mxu0 0
      %1617 = vmatpush1.bf16.msra.mxu0 %v1482
      %1618 = vmatprep.subr.bf16.mxu0 0
      %1619 = vmatpush1.bf16.msra.mxu0 %v1483
      %1620 = vmatprep.subr.bf16.mxu0 0
      %1621 = vmatpush1.bf16.msra.mxu0 %v1484
      %1622 = vmatprep.subr.bf16.mxu0 0
      %1623 = vmatpush1.bf16.msra.mxu0 %v1485
      %1624 = vmatprep.subr.bf16.mxu0 0
      %1625 = vmatpush1.bf16.msra.mxu0 %v1486
      %1626 = vmatprep.subr.bf16.mxu0 0
      %1627 = vmatpush1.bf16.msra.mxu0 %v1487
      %1628 = vmatprep.subr.bf16.mxu0 0
      %1629 = vmatpush1.bf16.msra.mxu0 %v1488
      %1630 = vmatprep.subr.bf16.mxu0 0
      %1631 = vmatpush1.bf16.msra.mxu0 %v1489
      %1632 = vmatprep.mubr.bf16.mxu0 %v1037
      %1633 = vmatmul.mubr.bf16.gmra.mrb[0].mxu0 %v982
      %v1634 = vpop.f32.mrb[0].mxu0
      %v1635 = vadd.f32 %v1328, %v1634
      %v1636 = vpop.f32.mrb[0].mxu0
      %v1637 = vpop.f32.mrb[0].mxu0
      %v1638 = vadd.f32 %v1328, %v1637
      %v1639 = vpop.f32.mrb[0].mxu0
      %1640 = vmatprep.mubr.bf16.mxu0 %v1041
      %1641 = vmatmul.mubr.bf16.gmra.mrb[0].mxu0 %v985
      %v1642 = vpop.f32.mrb[0].mxu0
      %v1643 = vadd.f32 %v1328, %v1642
      %v1644 = vpop.f32.mrb[0].mxu0
      %v1645 = vpop.f32.mrb[0].mxu0
      %v1646 = vadd.f32 %v1328, %v1645
      %v1647 = vpop.f32.mrb[0].mxu0
      %1648 = vmatprep.mubr.bf16.mxu0 %v1045
      %1649 = vmatmul.mubr.bf16.gmra.mrb[0].mxu0 %v988
      %v1650 = vpop.f32.mrb[0].mxu0
      %v1651 = vadd.f32 %v1328, %v1650
      %v1652 = vpop.f32.mrb[0].mxu0
      %v1653 = vpop.f32.mrb[0].mxu0
      %v1654 = vadd.f32 %v1328, %v1653
      %v1655 = vpop.f32.mrb[0].mxu0
      %1656 = vmatprep.mubr.bf16.mxu0 %v1049
      %1657 = vmatmul.mubr.bf16.gmra.mrb[0].mxu0 %v991
      %v1658 = vpop.f32.mrb[0].mxu0
      %v1659 = vadd.f32 %v1328, %v1658
      %v1660 = vpop.f32.mrb[0].mxu0
      %v1661 = vpop.f32.mrb[0].mxu0
      %v1662 = vadd.f32 %v1328, %v1661
      %v1663 = vpop.f32.mrb[0].mxu0
      %1664 = vmatprep.mubr.bf16.mxu0 %v1053
      %1665 = vmatmul.mubr.bf16.gmra.mrb[0].mxu0 %v994
      %v1666 = vpop.f32.mrb[0].mxu0
      %v1667 = vadd.f32 %v1328, %v1666
      %v1668 = vpop.f32.mrb[0].mxu0
      %v1669 = vpop.f32.mrb[0].mxu0
      %v1670 = vadd.f32 %v1328, %v1669
      %v1671 = vpop.f32.mrb[0].mxu0
      %1672 = vmatprep.mubr.bf16.mxu0 %v1057
      %1673 = vmatmul.mubr.bf16.gmra.mrb[0].mxu0 %v997
      %v1674 = vpop.f32.mrb[0].mxu0
      %v1675 = vadd.f32 %v1328, %v1674
      %v1676 = vpop.f32.mrb[0].mxu0
      %v1677 = vpop.f32.mrb[0].mxu0
      %v1678 = vadd.f32 %v1328, %v1677
      %v1679 = vpop.f32.mrb[0].mxu0
      %1680 = vmatprep.mubr.bf16.mxu0 %v1061
      %1681 = vmatmul.mubr.bf16.gmra.mrb[0].mxu0 %v1000
      %v1682 = vpop.f32.mrb[0].mxu0
      %v1683 = vadd.f32 %v1328, %v1682
      %v1684 = vpop.f32.mrb[0].mxu0
      %v1685 = vpop.f32.mrb[0].mxu0
      %v1686 = vadd.f32 %v1328, %v1685
      %v1687 = vpop.f32.mrb[0].mxu0
      %1688 = vmatprep.mubr.bf16.mxu0 %v1065
      %1689 = vmatmul.mubr.bf16.gmra.mrb[0].mxu0 %v1003
      %v1690 = vpop.f32.mrb[0].mxu0
      %v1691 = vadd.f32 %v1328, %v1690
      %v1692 = vpop.f32.mrb[0].mxu0
      %v1693 = vpop.f32.mrb[0].mxu0
      %v1694 = vadd.f32 %v1328, %v1693
      %v1695 = vpop.f32.mrb[0].mxu0
      %1696 = vmatprep.mubr.bf16.mxu0 %v1069
      %1697 = vmatmul.mubr.bf16.gmra.mrb[0].mxu0 %v1006
      %v1698 = vpop.f32.mrb[0].mxu0
      %v1699 = vadd.f32 %v1328, %v1698
      %v1700 = vpop.f32.mrb[0].mxu0
      %v1701 = vpop.f32.mrb[0].mxu0
      %v1702 = vadd.f32 %v1328, %v1701
      %v1703 = vpop.f32.mrb[0].mxu0
      %1704 = vmatprep.mubr.bf16.mxu0 %v1073
      %1705 = vmatmul.mubr.bf16.gmra.mrb[0].mxu0 %v1009
      %v1706 = vpop.f32.mrb[0].mxu0
      %v1707 = vadd.f32 %v1328, %v1706
      %v1708 = vpop.f32.mrb[0].mxu0
      %v1709 = vpop.f32.mrb[0].mxu0
      %v1710 = vadd.f32 %v1328, %v1709
      %v1711 = vpop.f32.mrb[0].mxu0
      %1712 = vmatprep.mubr.bf16.mxu0 %v1077
      %1713 = vmatmul.mubr.bf16.gmra.mrb[0].mxu0 %v1012
      %v1714 = vpop.f32.mrb[0].mxu0
      %v1715 = vadd.f32 %v1328, %v1714
      %v1716 = vpop.f32.mrb[0].mxu0
      %v1717 = vpop.f32.mrb[0].mxu0
      %v1718 = vadd.f32 %v1328, %v1717
      %v1719 = vpop.f32.mrb[0].mxu0
      %1720 = vmatprep.mubr.bf16.mxu0 %v1081
      %1721 = vmatmul.mubr.bf16.gmra.mrb[0].mxu0 %v1015
      %v1722 = vpop.f32.mrb[0].mxu0
      %v1723 = vadd.f32 %v1328, %v1722
      %v1724 = vpop.f32.mrb[0].mxu0
      %v1725 = vpop.f32.mrb[0].mxu0
      %v1726 = vadd.f32 %v1328, %v1725
      %v1727 = vpop.f32.mrb[0].mxu0
      %1728 = vmatprep.mubr.bf16.mxu0 %v1085
      %1729 = vmatmul.mubr.bf16.gmra.mrb[0].mxu0 %v1018
      %v1730 = vpop.f32.mrb[0].mxu0
      %v1731 = vadd.f32 %v1328, %v1730
      %v1732 = vpop.f32.mrb[0].mxu0
      %v1733 = vpop.f32.mrb[0].mxu0
      %v1734 = vadd.f32 %v1328, %v1733
      %v1735 = vpop.f32.mrb[0].mxu0
      %1736 = vmatprep.mubr.bf16.mxu0 %v1089
      %1737 = vmatmul.mubr.bf16.gmra.mrb[0].mxu0 %v1021
      %v1738 = vpop.f32.mrb[0].mxu0
      %v1739 = vadd.f32 %v1328, %v1738
      %v1740 = vpop.f32.mrb[0].mxu0
      %v1741 = vpop.f32.mrb[0].mxu0
      %v1742 = vadd.f32 %v1328, %v1741
      %v1743 = vpop.f32.mrb[0].mxu0
      %1744 = vmatprep.mubr.bf16.mxu0 %v1093
      %1745 = vmatmul.mubr.bf16.gmra.mrb[0].mxu0 %v1024
      %v1746 = vpop.f32.mrb[0].mxu0
      %v1747 = vadd.f32 %v1328, %v1746
      %v1748 = vpop.f32.mrb[0].mxu0
      %v1749 = vpop.f32.mrb[0].mxu0
      %v1750 = vadd.f32 %v1328, %v1749
      %v1751 = vpop.f32.mrb[0].mxu0
      %1752 = vmatprep.mubr.bf16.mxu0 %v1097
      %1753 = vmatmul.mubr.bf16.gmra.mrb[0].mxu0 %v1027
      %v1754 = vpop.f32.mrb[0].mxu0
      %v1755 = vadd.f32 %v1328, %v1754
      %v1756 = vpop.f32.mrb[0].mxu0
      %v1757 = vpop.f32.mrb[0].mxu0
      %v1758 = vadd.f32 %v1328, %v1757
      %v1759 = vpop.f32.mrb[0].mxu0
      %1760 = vmatprep.mubr.bf16.mxu0 %v1101
      %1761 = vmatmul.mubr.bf16.gmra.mrb[0].mxu0 %v1030
      %v1762 = vpop.f32.mrb[0].mxu0
      %v1763 = vadd.f32 %v1328, %v1762
      %v1764 = vpop.f32.mrb[0].mxu0
      %v1765 = vpop.f32.mrb[0].mxu0
      %v1766 = vadd.f32 %v1328, %v1765
      %v1767 = vpop.f32.mrb[0].mxu0
      %1768 = vmatprep.mubr.bf16.mxu0 %v1105
      %1769 = vmatmul.mubr.bf16.gmra.mrb[0].mxu0 %v1033
      %v1770 = vpop.f32.mrb[0].mxu0
      %v1771 = vadd.f32 %v1328, %v1770
      %v1772 = vpop.f32.mrb[0].mxu0
      %v1773 = vpop.f32.mrb[0].mxu0
      %v1774 = vadd.f32 %v1328, %v1773
      %v1775 = vpop.f32.mrb[0].mxu0
      %1776 = vdwg.mxu0
      %1777 = vmatprep.subr.bf16.mxu0 0
      %1778 = vmatpush1.bf16.msra.mxu0 %v1490
      %1779 = vmatprep.subr.bf16.mxu0 0
      %1780 = vmatpush1.bf16.msra.mxu0 %v1491
      %1781 = vmatprep.subr.bf16.mxu0 0
      %1782 = vmatpush1.bf16.msra.mxu0 %v1492
      %1783 = vmatprep.subr.bf16.mxu0 0
      %1784 = vmatpush1.bf16.msra.mxu0 %v1493
      %1785 = vmatprep.subr.bf16.mxu0 0
      %1786 = vmatpush1.bf16.msra.mxu0 %v1494
      %1787 = vmatprep.subr.bf16.mxu0 0
      %1788 = vmatpush1.bf16.msra.mxu0 %v1495
      %1789 = vmatprep.subr.bf16.mxu0 0
      %1790 = vmatpush1.bf16.msra.mxu0 %v1496
      %1791 = vmatprep.subr.bf16.mxu0 0
      %1792 = vmatpush1.bf16.msra.mxu0 %v1497
      %1793 = vmatprep.subr.bf16.mxu0 0
      %1794 = vmatpush1.bf16.msra.mxu0 %v1498
      %1795 = vmatprep.subr.bf16.mxu0 0
      %1796 = vmatpush1.bf16.msra.mxu0 %v1499
      %1797 = vmatprep.subr.bf16.mxu0 0
      %1798 = vmatpush1.bf16.msra.mxu0 %v1500
      %1799 = vmatprep.subr.bf16.mxu0 0
      %1800 = vmatpush1.bf16.msra.mxu0 %v1501
      %1801 = vmatprep.subr.bf16.mxu0 0
      %1802 = vmatpush1.bf16.msra.mxu0 %v1502
      %1803 = vmatprep.subr.bf16.mxu0 0
      %1804 = vmatpush1.bf16.msra.mxu0 %v1503
      %1805 = vmatprep.subr.bf16.mxu0 0
      %1806 = vmatpush1.bf16.msra.mxu0 %v1504
      %1807 = vmatprep.subr.bf16.mxu0 0
      %1808 = vmatpush1.bf16.msra.mxu0 %v1505
      %1809 = vmatprep.mubr.bf16.mxu0 %v1181
      %1810 = vmatmul.mubr.bf16.gmra.mrb[0].mxu0 %v1109
      %v1811 = vpop.f32.mrb[0].mxu0
      %v1812 = vadd.f32 %v1635, %v1811
      %v1813 = vpop.f32.mrb[0].mxu0
      %v1814 = vpop.f32.mrb[0].mxu0
      %v1815 = vadd.f32 %v1638, %v1814
      %v1816 = vpop.f32.mrb[0].mxu0
      %1817 = vmatprep.mubr.bf16.mxu0 %v1185
      %1818 = vmatmul.mubr.bf16.gmra.mrb[0].mxu0 %v1113
      %v1819 = vpop.f32.mrb[0].mxu0
      %v1820 = vadd.f32 %v1643, %v1819
      %v1821 = vpop.f32.mrb[0].mxu0
      %v1822 = vpop.f32.mrb[0].mxu0
      %v1823 = vadd.f32 %v1646, %v1822
      %v1824 = vpop.f32.mrb[0].mxu0
      %1825 = vmatprep.mubr.bf16.mxu0 %v1189
      %1826 = vmatmul.mubr.bf16.gmra.mrb[0].mxu0 %v1117
      %v1827 = vpop.f32.mrb[0].mxu0
      %v1828 = vadd.f32 %v1651, %v1827
      %v1829 = vpop.f32.mrb[0].mxu0
      %v1830 = vpop.f32.mrb[0].mxu0
      %v1831 = vadd.f32 %v1654, %v1830
      %v1832 = vpop.f32.mrb[0].mxu0
      %1833 = vmatprep.mubr.bf16.mxu0 %v1193
      %1834 = vmatmul.mubr.bf16.gmra.mrb[0].mxu0 %v1121
      %v1835 = vpop.f32.mrb[0].mxu0
      %v1836 = vadd.f32 %v1659, %v1835
      %v1837 = vpop.f32.mrb[0].mxu0
      %v1838 = vpop.f32.mrb[0].mxu0
      %v1839 = vadd.f32 %v1662, %v1838
      %v1840 = vpop.f32.mrb[0].mxu0
      %1841 = vmatprep.mubr.bf16.mxu0 %v1197
      %1842 = vmatmul.mubr.bf16.gmra.mrb[0].mxu0 %v1125
      %v1843 = vpop.f32.mrb[0].mxu0
      %v1844 = vadd.f32 %v1667, %v1843
      %v1845 = vpop.f32.mrb[0].mxu0
      %v1846 = vpop.f32.mrb[0].mxu0
      %v1847 = vadd.f32 %v1670, %v1846
      %v1848 = vpop.f32.mrb[0].mxu0
      %1849 = vmatprep.mubr.bf16.mxu0 %v1201
      %1850 = vmatmul.mubr.bf16.gmra.mrb[0].mxu0 %v1129
      %v1851 = vpop.f32.mrb[0].mxu0
      %v1852 = vadd.f32 %v1675, %v1851
      %v1853 = vpop.f32.mrb[0].mxu0
      %v1854 = vpop.f32.mrb[0].mxu0
      %v1855 = vadd.f32 %v1678, %v1854
      %v1856 = vpop.f32.mrb[0].mxu0
      %1857 = vmatprep.mubr.bf16.mxu0 %v1205
      %1858 = vmatmul.mubr.bf16.gmra.mrb[0].mxu0 %v1133
      %v1859 = vpop.f32.mrb[0].mxu0
      %v1860 = vadd.f32 %v1683, %v1859
      %v1861 = vpop.f32.mrb[0].mxu0
      %v1862 = vpop.f32.mrb[0].mxu0
      %v1863 = vadd.f32 %v1686, %v1862
      %v1864 = vpop.f32.mrb[0].mxu0
      %1865 = vmatprep.mubr.bf16.mxu0 %v1209
      %1866 = vmatmul.mubr.bf16.gmra.mrb[0].mxu0 %v1137
      %v1867 = vpop.f32.mrb[0].mxu0
      %v1868 = vadd.f32 %v1691, %v1867
      %v1869 = vpop.f32.mrb[0].mxu0
      %v1870 = vpop.f32.mrb[0].mxu0
      %v1871 = vadd.f32 %v1694, %v1870
      %v1872 = vpop.f32.mrb[0].mxu0
      %1873 = vmatprep.mubr.bf16.mxu0 %v1213
      %1874 = vmatmul.mubr.bf16.gmra.mrb[0].mxu0 %v1141
      %v1875 = vpop.f32.mrb[0].mxu0
      %v1876 = vadd.f32 %v1699, %v1875
      %v1877 = vpop.f32.mrb[0].mxu0
      %v1878 = vpop.f32.mrb[0].mxu0
      %v1879 = vadd.f32 %v1702, %v1878
      %v1880 = vpop.f32.mrb[0].mxu0
      %1881 = vmatprep.mubr.bf16.mxu0 %v1217
      %1882 = vmatmul.mubr.bf16.gmra.mrb[0].mxu0 %v1145
      %v1883 = vpop.f32.mrb[0].mxu0
      %v1884 = vadd.f32 %v1707, %v1883
      %v1885 = vpop.f32.mrb[0].mxu0
      %v1886 = vpop.f32.mrb[0].mxu0
      %v1887 = vadd.f32 %v1710, %v1886
      %v1888 = vpop.f32.mrb[0].mxu0
      %1889 = vmatprep.mubr.bf16.mxu0 %v1221
      %1890 = vmatmul.mubr.bf16.gmra.mrb[0].mxu0 %v1149
      %v1891 = vpop.f32.mrb[0].mxu0
      %v1892 = vadd.f32 %v1715, %v1891
      %v1893 = vpop.f32.mrb[0].mxu0
      %v1894 = vpop.f32.mrb[0].mxu0
      %v1895 = vadd.f32 %v1718, %v1894
      %v1896 = vpop.f32.mrb[0].mxu0
      %1897 = vmatprep.mubr.bf16.mxu0 %v1225
      %1898 = vmatmul.mubr.bf16.gmra.mrb[0].mxu0 %v1153
      %v1899 = vpop.f32.mrb[0].mxu0
      %v1900 = vadd.f32 %v1723, %v1899
      %v1901 = vpop.f32.mrb[0].mxu0
      %v1902 = vpop.f32.mrb[0].mxu0
      %v1903 = vadd.f32 %v1726, %v1902
      %v1904 = vpop.f32.mrb[0].mxu0
      %1905 = vmatprep.mubr.bf16.mxu0 %v1229
      %1906 = vmatmul.mubr.bf16.gmra.mrb[0].mxu0 %v1157
      %v1907 = vpop.f32.mrb[0].mxu0
      %v1908 = vadd.f32 %v1731, %v1907
      %v1909 = vpop.f32.mrb[0].mxu0
      %v1910 = vpop.f32.mrb[0].mxu0
      %v1911 = vadd.f32 %v1734, %v1910
      %v1912 = vpop.f32.mrb[0].mxu0
      %1913 = vmatprep.mubr.bf16.mxu0 %v1233
      %1914 = vmatmul.mubr.bf16.gmra.mrb[0].mxu0 %v1161
      %v1915 = vpop.f32.mrb[0].mxu0
      %v1916 = vadd.f32 %v1739, %v1915
      %v1917 = vpop.f32.mrb[0].mxu0
      %v1918 = vpop.f32.mrb[0].mxu0
      %v1919 = vadd.f32 %v1742, %v1918
      %v1920 = vpop.f32.mrb[0].mxu0
      %1921 = vmatprep.mubr.bf16.mxu0 %v1237
      %1922 = vmatmul.mubr.bf16.gmra.mrb[0].mxu0 %v1165
      %v1923 = vpop.f32.mrb[0].mxu0
      %v1924 = vadd.f32 %v1747, %v1923
      %v1925 = vpop.f32.mrb[0].mxu0
      %v1926 = vpop.f32.mrb[0].mxu0
      %v1927 = vadd.f32 %v1750, %v1926
      %v1928 = vpop.f32.mrb[0].mxu0
      %1929 = vmatprep.mubr.bf16.mxu0 %v1241
      %1930 = vmatmul.mubr.bf16.gmra.mrb[0].mxu0 %v1169
      %v1931 = vpop.f32.mrb[0].mxu0
      %v1932 = vadd.f32 %v1755, %v1931
      %v1933 = vpop.f32.mrb[0].mxu0
      %v1934 = vpop.f32.mrb[0].mxu0
      %v1935 = vadd.f32 %v1758, %v1934
      %v1936 = vpop.f32.mrb[0].mxu0
      %1937 = vmatprep.mubr.bf16.mxu0 %v1245
      %1938 = vmatmul.mubr.bf16.gmra.mrb[0].mxu0 %v1173
      %v1939 = vpop.f32.mrb[0].mxu0
      %v1940 = vadd.f32 %v1763, %v1939
      %v1941 = vpop.f32.mrb[0].mxu0
      %v1942 = vpop.f32.mrb[0].mxu0
      %v1943 = vadd.f32 %v1766, %v1942
      %v1944 = vpop.f32.mrb[0].mxu0
      %1945 = vmatprep.mubr.bf16.mxu0 %v1249
      %1946 = vmatmul.mubr.bf16.gmra.mrb[0].mxu0 %v1177
      %v1947 = vpop.f32.mrb[0].mxu0
      %v1948 = vadd.f32 %v1771, %v1947
      %v1949 = vpop.f32.mrb[0].mxu0
      %v1950 = vpop.f32.mrb[0].mxu0
      %v1951 = vadd.f32 %v1774, %v1950
      %v1952 = vpop.f32.mrb[0].mxu0
      %1953 = vdwg.mxu0
      %1954 = vmatprep.subr.bf16.mxu0 0
      %1955 = vmatpush1.bf16.msra.mxu0 %v1506
      %1956 = vmatprep.subr.bf16.mxu0 0
      %1957 = vmatpush1.bf16.msra.mxu0 %v1507
      %1958 = vmatprep.subr.bf16.mxu0 0
      %1959 = vmatpush1.bf16.msra.mxu0 %v1508
      %1960 = vmatprep.subr.bf16.mxu0 0
      %1961 = vmatpush1.bf16.msra.mxu0 %v1509
      %1962 = vmatprep.subr.bf16.mxu0 0
      %1963 = vmatpush1.bf16.msra.mxu0 0
      %1964 = vmatprep.subr.bf16.mxu0 0
      %1965 = vmatpush1.bf16.msra.mxu0 0
      %1966 = vmatprep.subr.bf16.mxu0 0
      %1967 = vmatpush1.bf16.msra.mxu0 0
      %1968 = vmatprep.subr.bf16.mxu0 0
      %1969 = vmatpush1.bf16.msra.mxu0 0
      %1970 = vmatprep.subr.bf16.mxu0 0
      %1971 = vmatpush1.bf16.msra.mxu0 0
      %1972 = vmatprep.subr.bf16.mxu0 0
      %1973 = vmatpush1.bf16.msra.mxu0 0
      %1974 = vmatprep.subr.bf16.mxu0 0
      %1975 = vmatpush1.bf16.msra.mxu0 0
      %1976 = vmatprep.subr.bf16.mxu0 0
      %1977 = vmatpush1.bf16.msra.mxu0 0
      %1978 = vmatprep.subr.bf16.mxu0 0
      %1979 = vmatpush1.bf16.msra.mxu0 0
      %1980 = vmatprep.subr.bf16.mxu0 0
      %1981 = vmatpush1.bf16.msra.mxu0 0
      %1982 = vmatprep.subr.bf16.mxu0 0
      %1983 = vmatpush1.bf16.msra.mxu0 0
      %1984 = vmatprep.subr.bf16.mxu0 0
      %1985 = vmatpush1.bf16.msra.mxu0 0
      %1986 = vmatprep.mubr.bf16.mxu0 0
      %1987 = vmatmul.mubr.bf16.gmra.mrb[0].mxu0 %v1547
      %v1988 = vpop.f32.mrb[0].mxu0
      %v1989 = vadd.f32 %v1812, %v1988
      %v1990 = vpop.f32.mrb[0].mxu0
      %v1991 = vpop.f32.mrb[0].mxu0
      %v1992 = vadd.f32 %v1815, %v1991
      %v1993 = vpop.f32.mrb[0].mxu0
      %1994 = vmatprep.mubr.bf16.mxu0 0
      %1995 = vmatmul.mubr.bf16.gmra.mrb[0].mxu0 %v1550
      %v1996 = vpop.f32.mrb[0].mxu0
      %v1997 = vadd.f32 %v1820, %v1996
      %v1998 = vpop.f32.mrb[0].mxu0
      %v1999 = vpop.f32.mrb[0].mxu0
      %v2000 = vadd.f32 %v1823, %v1999
      %v2001 = vpop.f32.mrb[0].mxu0
      %2002 = vmatprep.mubr.bf16.mxu0 0
      %2003 = vmatmul.mubr.bf16.gmra.mrb[0].mxu0 %v1553
      %v2004 = vpop.f32.mrb[0].mxu0
      %v2005 = vadd.f32 %v1828, %v2004
      %v2006 = vpop.f32.mrb[0].mxu0
      %v2007 = vpop.f32.mrb[0].mxu0
      %v2008 = vadd.f32 %v1831, %v2007
      %v2009 = vpop.f32.mrb[0].mxu0
      %2010 = vmatprep.mubr.bf16.mxu0 0
      %2011 = vmatmul.mubr.bf16.gmra.mrb[0].mxu0 %v1556
      %v2012 = vpop.f32.mrb[0].mxu0
      %v2013 = vadd.f32 %v1836, %v2012
      %v2014 = vpop.f32.mrb[0].mxu0
      %v2015 = vpop.f32.mrb[0].mxu0
      %v2016 = vadd.f32 %v1839, %v2015
      %v2017 = vpop.f32.mrb[0].mxu0
      %2018 = vmatprep.mubr.bf16.mxu0 0
      %2019 = vmatmul.mubr.bf16.gmra.mrb[0].mxu0 %v1559
      %v2020 = vpop.f32.mrb[0].mxu0
      %v2021 = vadd.f32 %v1844, %v2020
      %v2022 = vpop.f32.mrb[0].mxu0
      %v2023 = vpop.f32.mrb[0].mxu0
      %v2024 = vadd.f32 %v1847, %v2023
      %v2025 = vpop.f32.mrb[0].mxu0
      %2026 = vmatprep.mubr.bf16.mxu0 0
      %2027 = vmatmul.mubr.bf16.gmra.mrb[0].mxu0 %v1562
      %v2028 = vpop.f32.mrb[0].mxu0
      %v2029 = vadd.f32 %v1852, %v2028
      %v2030 = vpop.f32.mrb[0].mxu0
      %v2031 = vpop.f32.mrb[0].mxu0
      %v2032 = vadd.f32 %v1855, %v2031
      %v2033 = vpop.f32.mrb[0].mxu0
      %2034 = vmatprep.mubr.bf16.mxu0 0
      %2035 = vmatmul.mubr.bf16.gmra.mrb[0].mxu0 %v1565
      %v2036 = vpop.f32.mrb[0].mxu0
      %v2037 = vadd.f32 %v1860, %v2036
      %v2038 = vpop.f32.mrb[0].mxu0
      %v2039 = vpop.f32.mrb[0].mxu0
      %v2040 = vadd.f32 %v1863, %v2039
      %v2041 = vpop.f32.mrb[0].mxu0
      %2042 = vmatprep.mubr.bf16.mxu0 0
      %2043 = vmatmul.mubr.bf16.gmra.mrb[0].mxu0 %v1568
      %v2044 = vpop.f32.mrb[0].mxu0
      %v2045 = vadd.f32 %v1868, %v2044
      %v2046 = vpop.f32.mrb[0].mxu0
      %v2047 = vpop.f32.mrb[0].mxu0
      %v2048 = vadd.f32 %v1871, %v2047
      %v2049 = vpop.f32.mrb[0].mxu0
      %2050 = vmatprep.mubr.bf16.mxu0 0
      %2051 = vmatmul.mubr.bf16.gmra.mrb[0].mxu0 %v1571
      %v2052 = vpop.f32.mrb[0].mxu0
      %v2053 = vadd.f32 %v1876, %v2052
      %v2054 = vpop.f32.mrb[0].mxu0
      %v2055 = vpop.f32.mrb[0].mxu0
      %v2056 = vadd.f32 %v1879, %v2055
      %v2057 = vpop.f32.mrb[0].mxu0
      %2058 = vmatprep.mubr.bf16.mxu0 0
      %2059 = vmatmul.mubr.bf16.gmra.mrb[0].mxu0 %v1574
      %v2060 = vpop.f32.mrb[0].mxu0
      %v2061 = vadd.f32 %v1884, %v2060
      %v2062 = vpop.f32.mrb[0].mxu0
      %v2063 = vpop.f32.mrb[0].mxu0
      %v2064 = vadd.f32 %v1887, %v2063
      %v2065 = vpop.f32.mrb[0].mxu0
      %2066 = vmatprep.mubr.bf16.mxu0 0
      %2067 = vmatmul.mubr.bf16.gmra.mrb[0].mxu0 %v1577
      %v2068 = vpop.f32.mrb[0].mxu0
      %v2069 = vadd.f32 %v1892, %v2068
      %v2070 = vpop.f32.mrb[0].mxu0
      %v2071 = vpop.f32.mrb[0].mxu0
      %v2072 = vadd.f32 %v1895, %v2071
      %v2073 = vpop.f32.mrb[0].mxu0
      %2074 = vmatprep.mubr.bf16.mxu0 0
      %2075 = vmatmul.mubr.bf16.gmra.mrb[0].mxu0 %v1580
      %v2076 = vpop.f32.mrb[0].mxu0
      %v2077 = vadd.f32 %v1900, %v2076
      %v2078 = vpop.f32.mrb[0].mxu0
      %v2079 = vpop.f32.mrb[0].mxu0
      %v2080 = vadd.f32 %v1903, %v2079
      %v2081 = vpop.f32.mrb[0].mxu0
      %2082 = vmatprep.mubr.bf16.mxu0 0
      %2083 = vmatmul.mubr.bf16.gmra.mrb[0].mxu0 %v1583
      %v2084 = vpop.f32.mrb[0].mxu0
      %v2085 = vadd.f32 %v1908, %v2084
      %v2086 = vpop.f32.mrb[0].mxu0
      %v2087 = vpop.f32.mrb[0].mxu0
      %v2088 = vadd.f32 %v1911, %v2087
      %v2089 = vpop.f32.mrb[0].mxu0
      %2090 = vmatprep.mubr.bf16.mxu0 0
      %2091 = vmatmul.mubr.bf16.gmra.mrb[0].mxu0 %v1586
      %v2092 = vpop.f32.mrb[0].mxu0
      %v2093 = vadd.f32 %v1916, %v2092
      %v2094 = vpop.f32.mrb[0].mxu0
      %v2095 = vpop.f32.mrb[0].mxu0
      %v2096 = vadd.f32 %v1919, %v2095
      %v2097 = vpop.f32.mrb[0].mxu0
      %2098 = vmatprep.mubr.bf16.mxu0 0
      %2099 = vmatmul.mubr.bf16.gmra.mrb[0].mxu0 %v1589
      %v2100 = vpop.f32.mrb[0].mxu0
      %v2101 = vadd.f32 %v1924, %v2100
      %v2102 = vpop.f32.mrb[0].mxu0
      %v2103 = vpop.f32.mrb[0].mxu0
      %v2104 = vadd.f32 %v1927, %v2103
      %v2105 = vpop.f32.mrb[0].mxu0
      %2106 = vmatprep.mubr.bf16.mxu0 0
      %2107 = vmatmul.mubr.bf16.gmra.mrb[0].mxu0 %v1592
      %v2108 = vpop.f32.mrb[0].mxu0
      %v2109 = vadd.f32 %v1932, %v2108
      %v2110 = vpop.f32.mrb[0].mxu0
      %v2111 = vpop.f32.mrb[0].mxu0
      %v2112 = vadd.f32 %v1935, %v2111
      %v2113 = vpop.f32.mrb[0].mxu0
      %2114 = vmatprep.mubr.bf16.mxu0 0
      %2115 = vmatmul.mubr.bf16.gmra.mrb[0].mxu0 %v1595
      %v2116 = vpop.f32.mrb[0].mxu0
      %v2117 = vadd.f32 %v1940, %v2116
      %v2118 = vpop.f32.mrb[0].mxu0
      %v2119 = vpop.f32.mrb[0].mxu0
      %v2120 = vadd.f32 %v1943, %v2119
      %v2121 = vpop.f32.mrb[0].mxu0
      %2122 = vmatprep.mubr.bf16.mxu0 0
      %2123 = vmatmul.mubr.bf16.gmra.mrb[0].mxu0 %v1598
      %v2124 = vpop.f32.mrb[0].mxu0
      %v2125 = vadd.f32 %v1948, %v2124
      %v2126 = vpop.f32.mrb[0].mxu0
      %v2127 = vpop.f32.mrb[0].mxu0
      %v2128 = vadd.f32 %v1951, %v2127
      %v2129 = vpop.f32.mrb[0].mxu0
      %2130 = vdwg.mxu0
      %v2131 = vmax.f32 %v1989, 0.0
      %v2132 = vmax.f32 %v1992, 0.0
      %v2133 = vmax.f32 %v1997, 0.0
      %v2134 = vmax.f32 %v2000, 0.0
      %v2135 = vmax.f32 %v2005, 0.0
      %v2136 = vmax.f32 %v2008, 0.0
      %v2137 = vmax.f32 %v2013, 0.0
      %v2138 = vmax.f32 %v2016, 0.0
      %v2139 = vmax.f32 %v2021, 0.0
      %v2140 = vmax.f32 %v2024, 0.0
      %v2141 = vmax.f32 %v2029, 0.0
      %v2142 = vmax.f32 %v2032, 0.0
      %v2143 = vmax.f32 %v2037, 0.0
      %v2144 = vmax.f32 %v2040, 0.0
      %v2145 = vmax.f32 %v2045, 0.0
      %v2146 = vmax.f32 %v2048, 0.0
      %v2147 = vmax.f32 %v2053, 0.0
      %v2148 = vmax.f32 %v2056, 0.0
      %v2149 = vmax.f32 %v2061, 0.0
      %v2150 = vmax.f32 %v2064, 0.0
      %v2151 = vmax.f32 %v2069, 0.0
      %v2152 = vmax.f32 %v2072, 0.0
      %v2153 = vmax.f32 %v2077, 0.0
      %v2154 = vmax.f32 %v2080, 0.0
      %v2155 = vmax.f32 %v2085, 0.0
      %v2156 = vmax.f32 %v2088, 0.0
      %v2157 = vmax.f32 %v2093, 0.0
      %v2158 = vmax.f32 %v2096, 0.0
      %v2159 = vmax.f32 %v2101, 0.0
      %v2160 = vmax.f32 %v2104, 0.0
      %v2161 = vmax.f32 %v2109, 0.0
      %v2162 = vmax.f32 %v2112, 0.0
      %v2163 = vmax.f32 %v2117, 0.0
      %v2164 = vmax.f32 %v2120, 0.0
      %v2165 = vmax.f32 %v2125, 0.0
      %v2166 = vmax.f32 %v2128, 0.0
      %v2167 = vpack.c.bf16 %v2132, %v2131
      %v2168 = vpack.c.bf16 %v2134, %v2133
      %v2169 = vpack.c.bf16 %v2136, %v2135
      %v2170 = vpack.c.bf16 %v2138, %v2137
      %v2171 = vpack.c.bf16 %v2140, %v2139
      %v2172 = vpack.c.bf16 %v2142, %v2141
      %v2173 = vpack.c.bf16 %v2144, %v2143
      %v2174 = vpack.c.bf16 %v2146, %v2145
      %v2175 = vpack.c.bf16 %v2148, %v2147
      %v2176 = vpack.c.bf16 %v2150, %v2149
      %v2177 = vpack.c.bf16 %v2152, %v2151
      %v2178 = vpack.c.bf16 %v2154, %v2153
      %v2179 = vpack.c.bf16 %v2156, %v2155
      %v2180 = vpack.c.bf16 %v2158, %v2157
      %v2181 = vpack.c.bf16 %v2160, %v2159
      %v2182 = vpack.c.bf16 %v2162, %v2161
      %v2183 = vpack.c.bf16 %v2164, %v2163
      %v2184 = vpack.c.bf16 %v2166, %v2165
      %v2185 = vld [vmem:[%s3] sm:$0xf]
      %v2186 = vld [vmem:[%s3 + $0x4] sm:$0xf]
      %v2187 = vld [vmem:[%s3 + $0x8] sm:$0xf]
      %v2188 = vld [vmem:[%s3 + $0xc] sm:$0xf]
      %v2189 = vld [vmem:[%s3 + $0x10] sm:$0xf]
      %v2190 = vld [vmem:[%s3 + $0x14] sm:$0xf]
      %v2191 = vld [vmem:[%s3 + $0x18] sm:$0xf]
      %v2192 = vld [vmem:[%s3 + $0x1c] sm:$0xf]
      %v2201 = vunpack.c.l.b16 %v2185
      %v2202 = vunpack.c.l.b16 %v2186
      %v2203 = vunpack.c.l.b16 %v2187
      %v2204 = vunpack.c.l.b16 %v2188
      %v2205 = vunpack.c.l.b16 %v2189
      %v2206 = vunpack.c.l.b16 %v2190
      %v2207 = vunpack.c.l.b16 %v2191
      %v2208 = vunpack.c.l.b16 %v2192
      %v2209 = vpack.c.b16 %v2202, %v2201
      %v2210 = vpack.c.b16 %v2204, %v2203
      %v2211 = vpack.c.b16 %v2206, %v2205
      %v2212 = vpack.c.b16 %v2208, %v2207
      %v2218 = vsel %vm980, %v2167, 0
      %v2221 = vsel %vm980, %v2168, 0
      %v2224 = vsel %vm980, %v2169, 0
      %v2227 = vsel %vm980, %v2170, 0
      %v2230 = vsel %vm980, %v2171, 0
      %v2233 = vsel %vm980, %v2172, 0
      %v2236 = vsel %vm980, %v2173, 0
      %v2239 = vsel %vm980, %v2174, 0
      %v2242 = vsel %vm980, %v2175, 0
      %v2245 = vsel %vm980, %v2176, 0
      %v2248 = vsel %vm980, %v2177, 0
      %v2251 = vsel %vm980, %v2178, 0
      %v2254 = vsel %vm980, %v2179, 0
      %v2257 = vsel %vm980, %v2180, 0
      %v2260 = vsel %vm980, %v2181, 0
      %v2263 = vsel %vm980, %v2182, 0
      %v2266 = vsel %vm980, %v2183, 0
      %v2269 = vsel %vm980, %v2184, 0
      %2271 = vmatprep.subr.bf16.mxu0 0
      %2272 = vmatpush1.bf16.msra.mxu0 %v2209
      %2273 = vmatprep.subr.bf16.mxu0 0
      %2274 = vmatpush1.bf16.msra.mxu0 %v2210
      %2275 = vmatprep.subr.bf16.mxu0 0
      %2276 = vmatpush1.bf16.msra.mxu0 %v2211
      %2277 = vmatprep.subr.bf16.mxu0 0
      %2278 = vmatpush1.bf16.msra.mxu0 %v2212
      %2279 = vmatprep.subr.bf16.mxu0 0
      %2280 = vmatpush1.bf16.msra.mxu0 0
      %2281 = vmatprep.subr.bf16.mxu0 0
      %2282 = vmatpush1.bf16.msra.mxu0 0
      %2283 = vmatprep.subr.bf16.mxu0 0
      %2284 = vmatpush1.bf16.msra.mxu0 0
      %2285 = vmatprep.subr.bf16.mxu0 0
      %2286 = vmatpush1.bf16.msra.mxu0 0
      %2287 = vmatprep.subr.bf16.mxu0 0
      %2288 = vmatpush1.bf16.msra.mxu0 0
      %2289 = vmatprep.subr.bf16.mxu0 0
      %2290 = vmatpush1.bf16.msra.mxu0 0
      %2291 = vmatprep.subr.bf16.mxu0 0
      %2292 = vmatpush1.bf16.msra.mxu0 0
      %2293 = vmatprep.subr.bf16.mxu0 0
      %2294 = vmatpush1.bf16.msra.mxu0 0
      %2295 = vmatprep.subr.bf16.mxu0 0
      %2296 = vmatpush1.bf16.msra.mxu0 0
      %2297 = vmatprep.subr.bf16.mxu0 0
      %2298 = vmatpush1.bf16.msra.mxu0 0
      %2299 = vmatprep.subr.bf16.mxu0 0
      %2300 = vmatpush1.bf16.msra.mxu0 0
      %2301 = vmatprep.subr.bf16.mxu0 0
      %2302 = vmatpush1.bf16.msra.mxu0 0
      %2303 = vmatprep.mubr.bf16.mxu0 0
      %2304 = vmatmul.mubr.bf16.gmra.mrb[0].mxu0 %v2218
      %v2305 = vpop.f32.mrb[0].mxu0
      %v2306 = vadd.f32 0.0, %v2305
      %v2307 = vpop.f32.mrb[0].mxu0
      %v2308 = vpop.f32.mrb[0].mxu0
      %v2309 = vadd.f32 0.0, %v2308
      %v2310 = vpop.f32.mrb[0].mxu0
      %2311 = vmatprep.mubr.bf16.mxu0 0
      %2312 = vmatmul.mubr.bf16.gmra.mrb[0].mxu0 %v2221
      %v2313 = vpop.f32.mrb[0].mxu0
      %v2314 = vadd.f32 0.0, %v2313
      %v2315 = vpop.f32.mrb[0].mxu0
      %v2316 = vpop.f32.mrb[0].mxu0
      %v2317 = vadd.f32 0.0, %v2316
      %v2318 = vpop.f32.mrb[0].mxu0
      %2319 = vmatprep.mubr.bf16.mxu0 0
      %2320 = vmatmul.mubr.bf16.gmra.mrb[0].mxu0 %v2224
      %v2321 = vpop.f32.mrb[0].mxu0
      %v2322 = vadd.f32 0.0, %v2321
      %v2323 = vpop.f32.mrb[0].mxu0
      %v2324 = vpop.f32.mrb[0].mxu0
      %v2325 = vadd.f32 0.0, %v2324
      %v2326 = vpop.f32.mrb[0].mxu0
      %2327 = vmatprep.mubr.bf16.mxu0 0
      %2328 = vmatmul.mubr.bf16.gmra.mrb[0].mxu0 %v2227
      %v2329 = vpop.f32.mrb[0].mxu0
      %v2330 = vadd.f32 0.0, %v2329
      %v2331 = vpop.f32.mrb[0].mxu0
      %v2332 = vpop.f32.mrb[0].mxu0
      %v2333 = vadd.f32 0.0, %v2332
      %v2334 = vpop.f32.mrb[0].mxu0
      %2335 = vmatprep.mubr.bf16.mxu0 0
      %2336 = vmatmul.mubr.bf16.gmra.mrb[0].mxu0 %v2230
      %v2337 = vpop.f32.mrb[0].mxu0
      %v2338 = vadd.f32 0.0, %v2337
      %v2339 = vpop.f32.mrb[0].mxu0
      %v2340 = vpop.f32.mrb[0].mxu0
      %v2341 = vadd.f32 0.0, %v2340
      %v2342 = vpop.f32.mrb[0].mxu0
      %2343 = vmatprep.mubr.bf16.mxu0 0
      %2344 = vmatmul.mubr.bf16.gmra.mrb[0].mxu0 %v2233
      %v2345 = vpop.f32.mrb[0].mxu0
      %v2346 = vadd.f32 0.0, %v2345
      %v2347 = vpop.f32.mrb[0].mxu0
      %v2348 = vpop.f32.mrb[0].mxu0
      %v2349 = vadd.f32 0.0, %v2348
      %v2350 = vpop.f32.mrb[0].mxu0
      %2351 = vmatprep.mubr.bf16.mxu0 0
      %2352 = vmatmul.mubr.bf16.gmra.mrb[0].mxu0 %v2236
      %v2353 = vpop.f32.mrb[0].mxu0
      %v2354 = vadd.f32 0.0, %v2353
      %v2355 = vpop.f32.mrb[0].mxu0
      %v2356 = vpop.f32.mrb[0].mxu0
      %v2357 = vadd.f32 0.0, %v2356
      %v2358 = vpop.f32.mrb[0].mxu0
      %2359 = vmatprep.mubr.bf16.mxu0 0
      %2360 = vmatmul.mubr.bf16.gmra.mrb[0].mxu0 %v2239
      %v2361 = vpop.f32.mrb[0].mxu0
      %v2362 = vadd.f32 0.0, %v2361
      %v2363 = vpop.f32.mrb[0].mxu0
      %v2364 = vpop.f32.mrb[0].mxu0
      %v2365 = vadd.f32 0.0, %v2364
      %v2366 = vpop.f32.mrb[0].mxu0
      %2367 = vmatprep.mubr.bf16.mxu0 0
      %2368 = vmatmul.mubr.bf16.gmra.mrb[0].mxu0 %v2242
      %v2369 = vpop.f32.mrb[0].mxu0
      %v2370 = vadd.f32 0.0, %v2369
      %v2371 = vpop.f32.mrb[0].mxu0
      %v2372 = vpop.f32.mrb[0].mxu0
      %v2373 = vadd.f32 0.0, %v2372
      %v2374 = vpop.f32.mrb[0].mxu0
      %2375 = vmatprep.mubr.bf16.mxu0 0
      %2376 = vmatmul.mubr.bf16.gmra.mrb[0].mxu0 %v2245
      %v2377 = vpop.f32.mrb[0].mxu0
      %v2378 = vadd.f32 0.0, %v2377
      %v2379 = vpop.f32.mrb[0].mxu0
      %v2380 = vpop.f32.mrb[0].mxu0
      %v2381 = vadd.f32 0.0, %v2380
      %v2382 = vpop.f32.mrb[0].mxu0
      %2383 = vmatprep.mubr.bf16.mxu0 0
      %2384 = vmatmul.mubr.bf16.gmra.mrb[0].mxu0 %v2248
      %v2385 = vpop.f32.mrb[0].mxu0
      %v2386 = vadd.f32 0.0, %v2385
      %v2387 = vpop.f32.mrb[0].mxu0
      %v2388 = vpop.f32.mrb[0].mxu0
      %v2389 = vadd.f32 0.0, %v2388
      %v2390 = vpop.f32.mrb[0].mxu0
      %2391 = vmatprep.mubr.bf16.mxu0 0
      %2392 = vmatmul.mubr.bf16.gmra.mrb[0].mxu0 %v2251
      %v2393 = vpop.f32.mrb[0].mxu0
      %v2394 = vadd.f32 0.0, %v2393
      %v2395 = vpop.f32.mrb[0].mxu0
      %v2396 = vpop.f32.mrb[0].mxu0
      %v2397 = vadd.f32 0.0, %v2396
      %v2398 = vpop.f32.mrb[0].mxu0
      %2399 = vmatprep.mubr.bf16.mxu0 0
      %2400 = vmatmul.mubr.bf16.gmra.mrb[0].mxu0 %v2254
      %v2401 = vpop.f32.mrb[0].mxu0
      %v2402 = vadd.f32 0.0, %v2401
      %v2403 = vpop.f32.mrb[0].mxu0
      %v2404 = vpop.f32.mrb[0].mxu0
      %v2405 = vadd.f32 0.0, %v2404
      %v2406 = vpop.f32.mrb[0].mxu0
      %2407 = vmatprep.mubr.bf16.mxu0 0
      %2408 = vmatmul.mubr.bf16.gmra.mrb[0].mxu0 %v2257
      %v2409 = vpop.f32.mrb[0].mxu0
      %v2410 = vadd.f32 0.0, %v2409
      %v2411 = vpop.f32.mrb[0].mxu0
      %v2412 = vpop.f32.mrb[0].mxu0
      %v2413 = vadd.f32 0.0, %v2412
      %v2414 = vpop.f32.mrb[0].mxu0
      %2415 = vmatprep.mubr.bf16.mxu0 0
      %2416 = vmatmul.mubr.bf16.gmra.mrb[0].mxu0 %v2260
      %v2417 = vpop.f32.mrb[0].mxu0
      %v2418 = vadd.f32 0.0, %v2417
      %v2419 = vpop.f32.mrb[0].mxu0
      %v2420 = vpop.f32.mrb[0].mxu0
      %v2421 = vadd.f32 0.0, %v2420
      %v2422 = vpop.f32.mrb[0].mxu0
      %2423 = vmatprep.mubr.bf16.mxu0 0
      %2424 = vmatmul.mubr.bf16.gmra.mrb[0].mxu0 %v2263
      %v2425 = vpop.f32.mrb[0].mxu0
      %v2426 = vadd.f32 0.0, %v2425
      %v2427 = vpop.f32.mrb[0].mxu0
      %v2428 = vpop.f32.mrb[0].mxu0
      %v2429 = vadd.f32 0.0, %v2428
      %v2430 = vpop.f32.mrb[0].mxu0
      %2431 = vmatprep.mubr.bf16.mxu0 0
      %2432 = vmatmul.mubr.bf16.gmra.mrb[0].mxu0 %v2266
      %v2433 = vpop.f32.mrb[0].mxu0
      %v2434 = vadd.f32 0.0, %v2433
      %v2435 = vpop.f32.mrb[0].mxu0
      %v2436 = vpop.f32.mrb[0].mxu0
      %v2437 = vadd.f32 0.0, %v2436
      %v2438 = vpop.f32.mrb[0].mxu0
      %2439 = vmatprep.mubr.bf16.mxu0 0
      %2440 = vmatmul.mubr.bf16.gmra.mrb[0].mxu0 %v2269
      %v2441 = vpop.f32.mrb[0].mxu0
      %v2442 = vadd.f32 0.0, %v2441
      %v2443 = vpop.f32.mrb[0].mxu0
      %v2444 = vpop.f32.mrb[0].mxu0
      %v2445 = vadd.f32 0.0, %v2444
      %v2446 = vpop.f32.mrb[0].mxu0
      %2447 = vdwg.mxu0
      %v2448 = vpack.c.bf16 %v2309, %v2306
      %v2449 = vpack.c.bf16 %v2317, %v2314
      %v2450 = vpack.c.bf16 %v2325, %v2322
      %v2451 = vpack.c.bf16 %v2333, %v2330
      %v2452 = vpack.c.bf16 %v2341, %v2338
      %v2453 = vpack.c.bf16 %v2349, %v2346
      %v2454 = vpack.c.bf16 %v2357, %v2354
      %v2455 = vpack.c.bf16 %v2365, %v2362
      %v2456 = vpack.c.bf16 %v2373, %v2370
      %v2457 = vpack.c.bf16 %v2381, %v2378
      %v2458 = vpack.c.bf16 %v2389, %v2386
      %v2459 = vpack.c.bf16 %v2397, %v2394
      %v2460 = vpack.c.bf16 %v2405, %v2402
      %v2461 = vpack.c.bf16 %v2413, %v2410
      %v2462 = vpack.c.bf16 %v2421, %v2418
      %v2463 = vpack.c.bf16 %v2429, %v2426
      %v2464 = vpack.c.bf16 %v2437, %v2434
      %v2465 = vpack.c.bf16 %v2445, %v2442
      %v2484 = vunpack.c.l.b16 %v2448
      %v2485 = vunpack.c.h.b16 %v2448
      %v2486 = vunpack.c.l.b16 %v2449
      %v2487 = vunpack.c.h.b16 %v2449
      %v2488 = vunpack.c.l.b16 %v2450
      %v2489 = vunpack.c.h.b16 %v2450
      %v2490 = vunpack.c.l.b16 %v2451
      %v2491 = vunpack.c.h.b16 %v2451
      %v2492 = vunpack.c.l.b16 %v2452
      %v2493 = vunpack.c.h.b16 %v2452
      %v2494 = vunpack.c.l.b16 %v2453
      %v2495 = vunpack.c.h.b16 %v2453
      %v2496 = vunpack.c.l.b16 %v2454
      %v2497 = vunpack.c.h.b16 %v2454
      %v2498 = vunpack.c.l.b16 %v2455
      %v2499 = vunpack.c.h.b16 %v2455
      %v2500 = vunpack.c.l.b16 %v2456
      %v2501 = vunpack.c.h.b16 %v2456
      %v2502 = vunpack.c.l.b16 %v2457
      %v2503 = vunpack.c.h.b16 %v2457
      %v2504 = vunpack.c.l.b16 %v2458
      %v2505 = vunpack.c.h.b16 %v2458
      %v2506 = vunpack.c.l.b16 %v2459
      %v2507 = vunpack.c.h.b16 %v2459
      %v2508 = vunpack.c.l.b16 %v2460
      %v2509 = vunpack.c.h.b16 %v2460
      %v2510 = vunpack.c.l.b16 %v2461
      %v2511 = vunpack.c.h.b16 %v2461
      %v2512 = vunpack.c.l.b16 %v2462
      %v2513 = vunpack.c.h.b16 %v2462
      %v2514 = vunpack.c.l.b16 %v2463
      %v2515 = vunpack.c.h.b16 %v2463
      %v2516 = vunpack.c.l.b16 %v2464
      %v2517 = vunpack.c.h.b16 %v2464
      %v2518 = vunpack.c.l.b16 %v2465
      %v2519 = vunpack.c.h.b16 %v2465
      %v2520 = vpack.c.b16 %v2484, %v2484
      %v2521 = vpack.c.b16 %v2485, %v2485
      %v2522 = vpack.c.b16 %v2486, %v2486
      %v2523 = vpack.c.b16 %v2487, %v2487
      %v2524 = vpack.c.b16 %v2488, %v2488
      %v2525 = vpack.c.b16 %v2489, %v2489
      %v2526 = vpack.c.b16 %v2490, %v2490
      %v2527 = vpack.c.b16 %v2491, %v2491
      %v2528 = vpack.c.b16 %v2492, %v2492
      %v2529 = vpack.c.b16 %v2493, %v2493
      %v2530 = vpack.c.b16 %v2494, %v2494
      %v2531 = vpack.c.b16 %v2495, %v2495
      %v2532 = vpack.c.b16 %v2496, %v2496
      %v2533 = vpack.c.b16 %v2497, %v2497
      %v2534 = vpack.c.b16 %v2498, %v2498
      %v2535 = vpack.c.b16 %v2499, %v2499
      %v2536 = vpack.c.b16 %v2500, %v2500
      %v2537 = vpack.c.b16 %v2501, %v2501
      %v2538 = vpack.c.b16 %v2502, %v2502
      %v2539 = vpack.c.b16 %v2503, %v2503
      %v2540 = vpack.c.b16 %v2504, %v2504
      %v2541 = vpack.c.b16 %v2505, %v2505
      %v2542 = vpack.c.b16 %v2506, %v2506
      %v2543 = vpack.c.b16 %v2507, %v2507
      %v2544 = vpack.c.b16 %v2508, %v2508
      %v2545 = vpack.c.b16 %v2509, %v2509
      %v2546 = vpack.c.b16 %v2510, %v2510
      %v2547 = vpack.c.b16 %v2511, %v2511
      %v2548 = vpack.c.b16 %v2512, %v2512
      %v2549 = vpack.c.b16 %v2513, %v2513
      %v2550 = vpack.c.b16 %v2514, %v2514
      %v2551 = vpack.c.b16 %v2515, %v2515
      %v2552 = vpack.c.b16 %v2516, %v2516
      %v2553 = vpack.c.b16 %v2517, %v2517
      %v2554 = vpack.c.b16 %v2518, %v2518
      %v2555 = vpack.c.b16 %v2519, %v2519
      %2592 = vst [vmem:[%s197] sm:$0xf] %v2520
      %2593 = vst [vmem:[%s197 + $0x4] sm:$0xf] %v2521
      %2594 = vst [vmem:[%s197 + $0x8] sm:$0xf] %v2522
      %2595 = vst [vmem:[%s197 + $0xc] sm:$0xf] %v2523
      %2596 = vst [vmem:[%s197 + $0x10] sm:$0xf] %v2524
      %2597 = vst [vmem:[%s197 + $0x14] sm:$0xf] %v2525
      %2598 = vst [vmem:[%s197 + $0x18] sm:$0xf] %v2526
      %2599 = vst [vmem:[%s197 + $0x1c] sm:$0xf] %v2527
      %2600 = vst [vmem:[%s197 + $0x20] sm:$0xf] %v2528
      %2601 = vst [vmem:[%s197 + $0x24] sm:$0xf] %v2529
      %2602 = vst [vmem:[%s197 + $0x28] sm:$0xf] %v2530
      %2603 = vst [vmem:[%s197 + $0x2c] sm:$0xf] %v2531
      %2604 = vst [vmem:[%s197 + $0x30] sm:$0xf] %v2532
      %2605 = vst [vmem:[%s197 + $0x34] sm:$0xf] %v2533
      %2606 = vst [vmem:[%s197 + $0x38] sm:$0xf] %v2534
      %2607 = vst [vmem:[%s197 + $0x3c] sm:$0xf] %v2535
      %2608 = vst [vmem:[%s197 + $0x40] sm:$0xf] %v2536
      %2609 = vst [vmem:[%s197 + $0x44] sm:$0xf] %v2537
      %2610 = vst [vmem:[%s197 + $0x48] sm:$0xf] %v2538
      %2611 = vst [vmem:[%s197 + $0x4c] sm:$0xf] %v2539
      %2612 = vst [vmem:[%s197 + $0x50] sm:$0xf] %v2540
      %2613 = vst [vmem:[%s197 + $0x54] sm:$0xf] %v2541
      %2614 = vst [vmem:[%s197 + $0x58] sm:$0xf] %v2542
      %2615 = vst [vmem:[%s197 + $0x5c] sm:$0xf] %v2543
      %2616 = vst [vmem:[%s197 + $0x60] sm:$0xf] %v2544
      %2617 = vst [vmem:[%s197 + $0x64] sm:$0xf] %v2545
      %2618 = vst [vmem:[%s197 + $0x68] sm:$0xf] %v2546
      %2619 = vst [vmem:[%s197 + $0x6c] sm:$0xf] %v2547
      %2620 = vst [vmem:[%s197 + $0x70] sm:$0xf] %v2548
      %2621 = vst [vmem:[%s197 + $0x74] sm:$0xf] %v2549
      %2622 = vst [vmem:[%s197 + $0x78] sm:$0xf] %v2550
      %2623 = vst [vmem:[%s197 + $0x7c] sm:$0xf] %v2551
      %2624 = vst [vmem:[%s197 + $0x80] sm:$0xf] %v2552
      %2625 = vst [vmem:[%s197 + $0x84] sm:$0xf] %v2553
      %2626 = vst [vmem:[%s197 + $0x88] sm:$0xf] %v2554
      %2627 = vst [vmem:[%s197 + $0x8c] sm:$0xf] %v2555
      %p2628 = scmp.lt.s32.totalorder %s15, 1
      %s2629 = scalar_select %p2628, %s15, 1
      %s2630 = smul.addr %s2629, 36
      %s2631 = smul.addr %s2630, 4
      %s2632 = scalar_lea.vmem %s4, %s2631
      // Predicated region
      $region37: #{bridge_up1_forward.1} parent=35 // pred_check
        %p2633 = pneg %p122
      $region38: #{bridge_up1_forward.1} parent=35 // pred_check_branch
        %2635 = sbr.rel (%p2633) target = $region40
      $region39: #{bridge_up1_forward.1} parent=35 // pred_region
        _
      $region40: #{bridge_up1_forward.1} parent=35 // pred_fallthru
        _
    $region36: #{bridge_up1_forward.1} parent=5 // pred_fallthru
      _
    %p2636 = scmp.le.s32.totalorder 2, %s10
    // Predicated region
    $region41: #{bridge_up1_forward.1} parent=5 // pred_check
      %p2637 = pneg %p2636
    $region42: #{bridge_up1_forward.1} parent=5 // pred_check_branch
      %2639 = sbr.rel (%p2637) target = $region44
    $region43: #{bridge_up1_forward.1} parent=5 // pred_region
      %s2640 = ssub.s32 %s10, 2
      // Predicated region
      $region45: #{bridge_up1_forward.1} parent=43 // pred_check
        %p2641 = pneg %p128
      $region46: #{bridge_up1_forward.1} parent=43 // pred_check_branch
        %2643 = sbr.rel (%p2641) target = $region48
      $region47: #{bridge_up1_forward.1} parent=43 // pred_region
        %p2644 = scmp.lt.s32.totalorder %s16, 1
        %s2645 = scalar_select %p2644, %s16, 1
        %s2646 = smul.addr %s2645, 36
        %s2647 = smul.addr %s2646, 4
        %s2648 = scalar_lea.vmem %s4, %s2647
      $region48: #{bridge_up1_forward.1} parent=43 // pred_fallthru
        _
    $region44: #{bridge_up1_forward.1} parent=5 // pred_fallthru
      _
  $region6: #{bridge_up1_forward.1} parent=0 // loop_footer
    %s14 = sadd.s32 1, %s10
  $region7: #{bridge_up1_forward.1} parent=0 // loop_footer_branch
    %9 = sbr.rel target = $region3
  $region8: #{bridge_up1_forward.1} parent=0 // loop_exit
    _

</llo_original>
